<compile_context>
chip_gen: v5e
topology: v5e:2x2
jax: 0.10.0
libtpu: 0.0.40
codegen_flags: <defaults>
</compile_context>

<pallas_src>
import functools

import numpy as np

import jax
import jax.numpy as jnp
from jax.experimental import pallas as pl
from jax.experimental.pallas import tpu as pltpu


# ----------------------------------------------------------------------------
# Helpers
# ----------------------------------------------------------------------------
def _round_up(x, m):
    return ((x + m - 1) // m) * m


def _vmem_limit_bytes():
    # Generation-aware scoped-VMEM limit (v7x has only 64 MiB physical).
    try:
        info = pltpu.get_tpu_info()
        cap = int(getattr(info, "vmem_capacity_bytes", 64 * 1024 * 1024))
    except Exception:
        cap = 64 * 1024 * 1024
    return max(32 * 1024 * 1024, min(int(cap * 0.7), 96 * 1024 * 1024))


_VMEM_LIMIT = _vmem_limit_bytes()


def _pick_tn(np_):
    assert np_ % 128 == 0
    if np_ <= 128:
        return np_
    if np_ <= 1024:
        return np_ // 2        # >= 2 N-blocks so both v7x TensorCores get work
    return 512


@functools.lru_cache(maxsize=None)
def _spatial_cfg(h, w):
    """Layout constants for the 'padded-flat' activation format used by the
    fused stride-1 bottleneck kernel."""
    assert h >= 1 and w >= 1
    wp = w + 2
    hp = h + 2
    rp = _round_up(hp * wp, 8)            # rows of the padded-flat activation
    lead = _round_up(wp + 1, 8)           # zero lead rows in the 3x3 scratch
    rs = _round_up(lead + rp + wp + 1, 8)  # scratch rows (covers all 9 shifts)
    return wp, rp, lead, rs


@functools.lru_cache(maxsize=None)
def _valid_mask_np(h, w):
    """(rp, 1) f32 mask: 1.0 on interior rows of the padded-flat layout."""
    wp, rp, _, _ = _spatial_cfg(h, w)
    m = np.zeros((rp, 1), np.float32)
    for j in range((h + 2) * wp):
        r, c = divmod(j, wp)
        if 1 <= r <= h and 1 <= c <= w:
            m[j, 0] = 1.0
    return m


# ----------------------------------------------------------------------------
# Pallas kernels
# ----------------------------------------------------------------------------
def matmul_bn_kernel(a_ref, w_ref, s_ref, t_ref, o_ref, *, relu):
    """bf16 matmul (full-K block) with folded-BN scale/bias (+ReLU) epilogue;
    f32 accumulation, bf16 output."""
    y = jnp.dot(a_ref[...], w_ref[...], preferred_element_type=jnp.float32)
    y = y * s_ref[...] + t_ref[...]
    if relu:
        y = jnp.maximum(y, 0.0)
    o_ref[...] = y.astype(o_ref.dtype)


def matmul_bn_res_kernel(a_ref, w_ref, s_ref, t_ref, r_ref, o_ref, *, relu):
    """Same as matmul_bn_kernel but also fuses the residual add before ReLU."""
    y = jnp.dot(a_ref[...], w_ref[...], preferred_element_type=jnp.float32)
    y = y * s_ref[...] + t_ref[...] + r_ref[...].astype(jnp.float32)
    if relu:
        y = jnp.maximum(y, 0.0)
    o_ref[...] = y.astype(o_ref.dtype)


def fused_bottleneck_kernel(x_ref, mask_ref, w1_ref, s1_ref, b1_ref,
                            w2_ref, s2_ref, b2_ref, w3_ref, s3_ref, b3_ref,
                            o_ref, h1s_ref, *, wp, lead):
    """One full stride-1 bottleneck (1x1 -> 3x3(s1,p1) -> 1x1 + residual, all
    with folded BN + ReLU) for a single batch item, fully resident in VMEM.

    x_ref / o_ref hold the activation in 'padded-flat' layout: the spatially
    zero-padded (H+2, W+2) image flattened to rp rows.  mask_ref marks the
    interior rows so the 3x3 stage only sees real pixels.  The 3x3 conv is 9
    row-shifted matmuls against a zero-extended copy of the hidden activation
    (h1s_ref); the shift origin is chosen so the conv2 output rows line up with
    the padded-flat layout, letting conv3 + residual + store happen in place.
    """
    rp = x_ref.shape[1]
    wd = w2_ref.shape[2]
    x = x_ref[0]

    # conv1 (1x1) + BN + ReLU, masked to the interior rows.
    h1 = jnp.dot(x, w1_ref[...], preferred_element_type=jnp.float32)
    h1 = jnp.maximum(h1 * s1_ref[...] + b1_ref[...], 0.0) * mask_ref[...]
    # f32 scratch: misaligned sublane slices of packed bf16 are riskier to
    # lower; the per-tap bf16 cast below runs once per block (not per N-tile).
    h1s_ref[...] = jnp.zeros_like(h1s_ref)
    h1s_ref[lead:lead + rp, :] = h1

    # conv2 (3x3 stride 1 pad 1): 9 shifted matmuls; row p of acc corresponds
    # to padded-flat position p.
    acc = jnp.zeros((rp, wd), jnp.float32)
    for kh in range(3):
        for kw in range(3):
            sh = lead - (wp + 1) + kh * wp + kw
            a_tap = h1s_ref[sh:sh + rp, :].astype(jnp.bfloat16)
            acc = acc + jnp.dot(a_tap, w2_ref[kh * 3 + kw],
                                preferred_element_type=jnp.float32)
    h2 = jnp.maximum(acc * s2_ref[...] + b2_ref[...], 0.0).astype(jnp.bfloat16)

    # conv3 (1x1) + BN + residual + ReLU (residual is x itself, same layout).
    y = jnp.dot(h2, w3_ref[...], preferred_element_type=jnp.float32)
    y = jnp.maximum(y * s3_ref[...] + b3_ref[...] + x.astype(jnp.float32), 0.0)
    o_ref[0] = y.astype(o_ref.dtype)


def fused_bottleneck_1x1_kernel(x_ref, w1_ref, s1_ref, b1_ref,
                                w2_ref, s2_ref, b2_ref,
                                w3_ref, s3_ref, b3_ref, o_ref):
    """Stride-1 bottleneck on a 1x1 feature map: the pad-1 3x3 reduces to its
    center tap, so the whole block is three fused matmuls + residual."""
    x = x_ref[0]
    h1 = jnp.dot(x, w1_ref[...], preferred_element_type=jnp.float32)
    h1 = jnp.maximum(h1 * s1_ref[...] + b1_ref[...], 0.0).astype(jnp.bfloat16)
    h2 = jnp.dot(h1, w2_ref[...], preferred_element_type=jnp.float32)
    h2 = jnp.maximum(h2 * s2_ref[...] + b2_ref[...], 0.0).astype(jnp.bfloat16)
    y = jnp.dot(h2, w3_ref[...], preferred_element_type=jnp.float32)
    y = jnp.maximum(y * s3_ref[...] + b3_ref[...] + x.astype(jnp.float32), 0.0)
    o_ref[0] = y.astype(o_ref.dtype)


def max_reduce_kernel(x_ref, o_ref):
    # x_ref: (9, tm, C) -> max over the 9 pooling-window taps
    o_ref[...] = jnp.max(x_ref[...], axis=0)


def avgpool_kernel(x_ref, o_ref, *, inv):
    # x_ref: (B, HW, tc) bf16 -> mean over spatial positions, f32 out
    o_ref[...] = jnp.sum(x_ref[...].astype(jnp.float32), axis=1) * inv


# ----------------------------------------------------------------------------
# Pallas wrappers
# ----------------------------------------------------------------------------
def matmul_bn(a, w, scale, bias, relu, residual=None):
    """out = maybe_relu((a @ w) * scale + bias [+ residual]), bf16 in/out.

    a: (M, K) bf16;  w: (Kw, Np) bf16 with Kw >= K and Np a multiple of 128;
    scale/bias: (1, Np) f32; residual: (M, Np) bf16 or None."""
    M, K = a.shape
    Kw, Np = w.shape
    assert K <= Kw and Kw <= 4608  # full-K blocks: every conv here fits VMEM
    a = a.astype(jnp.bfloat16)
    if K < Kw:
        a = jnp.pad(a, ((0, 0), (0, Kw - K)))
    tm = min(256, _round_up(M, 8))
    Mp = _round_up(M, tm)
    if Mp != M:
        a = jnp.pad(a, ((0, Mp - M), (0, 0)))
    tn = _pick_tn(Np)
    tk = Kw

    in_specs = [
        pl.BlockSpec((tm, tk), lambda i, j: (i, 0)),
        pl.BlockSpec((tk, tn), lambda i, j: (0, j)),
        pl.BlockSpec((1, tn), lambda i, j: (0, j)),
        pl.BlockSpec((1, tn), lambda i, j: (0, j)),
    ]
    args = [a, w, scale, bias]
    if residual is not None:
        r = residual.astype(jnp.bfloat16)
        if Mp != M:
            r = jnp.pad(r, ((0, Mp - M), (0, 0)))
        in_specs.append(pl.BlockSpec((tm, tn), lambda i, j: (i, j)))
        args.append(r)
        kern = functools.partial(matmul_bn_res_kernel, relu=relu)
    else:
        kern = functools.partial(matmul_bn_kernel, relu=relu)

    out = pl.pallas_call(
        kern,
        out_shape=jax.ShapeDtypeStruct((Mp, Np), jnp.bfloat16),
        grid_spec=pltpu.PrefetchScalarGridSpec(
            num_scalar_prefetch=0,
            grid=(Mp // tm, Np // tn),
            in_specs=in_specs,
            out_specs=pl.BlockSpec((tm, tn), lambda i, j: (i, j)),
        ),
        compiler_params=pltpu.CompilerParams(
            dimension_semantics=("parallel", "parallel"),
            vmem_limit_bytes=_VMEM_LIMIT,
        ),
    )(*args)
    return out[:M] if Mp != M else out


def conv1x1_bn(x, w, scale, bias, *, stride=1, relu=True, residual=None):
    """1x1 conv (optionally strided) + BN (+ residual) (+ ReLU). NHWC bf16."""
    if stride > 1:
        x = x[:, ::stride, ::stride, :]
    B, OH, OW, Cin = x.shape
    A = x.reshape(B * OH * OW, Cin)
    r2 = None
    if residual is not None:
        r2 = residual.reshape(B * OH * OW, residual.shape[-1])
    out = matmul_bn(A, w, scale, bias, relu, residual=r2)
    return out.reshape(B, OH, OW, -1)


def conv_im2col_bn(x, w, scale, bias, *, ksize, stride, padding, relu):
    """General KxK conv via im2col + fused matmul/BN (7x7 stem + the three
    stride-2 3x3 convs + stage-1's first 3x3)."""
    B, H, W, Cin = x.shape
    if padding > 0:
        x = jnp.pad(x, ((0, 0), (padding, padding), (padding, padding), (0, 0)))
    Hp, Wp = x.shape[1], x.shape[2]
    OH = (Hp - ksize) // stride + 1
    OW = (Wp - ksize) // stride + 1
    cols = []
    for kh in range(ksize):
        for kw in range(ksize):
            cols.append(x[:, kh:kh + stride * (OH - 1) + 1:stride,
                          kw:kw + stride * (OW - 1) + 1:stride, :])
    A = jnp.concatenate(cols, axis=-1).reshape(B * OH * OW, ksize * ksize * Cin)
    out = matmul_bn(A, w, scale, bias, relu)
    return out.reshape(B, OH, OW, -1)


def maxpool_3x3_s2_p1(x):
    """NHWC max pool, kernel 3, stride 2, padding 1 (the resnet stem pool).
    Channels are already padded to 128 -> lane-dense blocks."""
    B, H, W, C = x.shape
    # input is post-ReLU (>= 0), so zero padding is equivalent to -inf padding
    xp = jnp.pad(x, ((0, 0), (1, 1), (1, 1), (0, 0)))
    OH = (H + 2 - 3) // 2 + 1
    OW = (W + 2 - 3) // 2 + 1
    wins = [xp[:, kh:kh + 2 * (OH - 1) + 1:2, kw:kw + 2 * (OW - 1) + 1:2, :]
            for kh in range(3) for kw in range(3)]
    stacked = jnp.stack(wins, axis=0).reshape(9, B * OH * OW, C)
    M = B * OH * OW
    tm = min(512, _round_up(M, 8))
    Mp = _round_up(M, tm)
    if Mp != M:
        stacked = jnp.pad(stacked, ((0, 0), (0, Mp - M), (0, 0)))
    out = pl.pallas_call(
        max_reduce_kernel,
        out_shape=jax.ShapeDtypeStruct((Mp, C), x.dtype),
        grid_spec=pltpu.PrefetchScalarGridSpec(
            num_scalar_prefetch=0,
            grid=(Mp // tm,),
            in_specs=[pl.BlockSpec((9, tm, C), lambda i: (0, i, 0))],
            out_specs=pl.BlockSpec((tm, C), lambda i: (i, 0)),
        ),
        compiler_params=pltpu.CompilerParams(
            dimension_semantics=("parallel",),
            vmem_limit_bytes=_VMEM_LIMIT,
        ),
    )(stacked)
    out = out[:M] if Mp != M else out
    return out.reshape(B, OH, OW, C)


def global_avgpool(x):
    """(B, H, W, C) bf16 -> (B, C) f32 mean over spatial positions."""
    B, H, W, C = x.shape
    HW = H * W
    xr = x.reshape(B, HW, C)
    tc = 512 if C % 512 == 0 else (256 if C % 256 == 0 else C)
    return pl.pallas_call(
        functools.partial(avgpool_kernel, inv=1.0 / HW),
        out_shape=jax.ShapeDtypeStruct((B, C), jnp.float32),
        grid_spec=pltpu.PrefetchScalarGridSpec(
            num_scalar_prefetch=0,
            grid=(C // tc,),
            in_specs=[pl.BlockSpec((B, HW, tc), lambda j: (0, 0, j))],
            out_specs=pl.BlockSpec((B, tc), lambda j: (0, j)),
        ),
        compiler_params=pltpu.CompilerParams(
            dimension_semantics=("parallel",),
            vmem_limit_bytes=_VMEM_LIMIT,
        ),
    )(xr)


# ----------------------------------------------------------------------------
# Fused stride-1 bottlenecks (one pallas_call per block)
# ----------------------------------------------------------------------------
@functools.partial(jax.jit, static_argnames=("h", "w"))
def _fused_bottleneck_spatial(xpf, blk, *, h, w):
    wp, rp, lead, rs = _spatial_cfg(h, w)
    B, rp_in, cin = xpf.shape
    wd = blk["w2"].shape[1]
    cout = blk["w3"].shape[1]
    assert rp_in == rp and cin == cout
    mask = jnp.asarray(_valid_mask_np(h, w))
    kern = functools.partial(fused_bottleneck_kernel, wp=wp, lead=lead)
    return pl.pallas_call(
        kern,
        out_shape=jax.ShapeDtypeStruct((B, rp, cout), jnp.bfloat16),
        grid_spec=pltpu.PrefetchScalarGridSpec(
            num_scalar_prefetch=0,
            grid=(B,),
            in_specs=[
                pl.BlockSpec((1, rp, cin), lambda b: (b, 0, 0)),
                pl.BlockSpec((rp, 1), lambda b: (0, 0)),
                pl.BlockSpec((cin, wd), lambda b: (0, 0)),
                pl.BlockSpec((1, wd), lambda b: (0, 0)),
                pl.BlockSpec((1, wd), lambda b: (0, 0)),
                pl.BlockSpec((9, wd, wd), lambda b: (0, 0, 0)),
                pl.BlockSpec((1, wd), lambda b: (0, 0)),
                pl.BlockSpec((1, wd), lambda b: (0, 0)),
                pl.BlockSpec((wd, cout), lambda b: (0, 0)),
                pl.BlockSpec((1, cout), lambda b: (0, 0)),
                pl.BlockSpec((1, cout), lambda b: (0, 0)),
            ],
            out_specs=pl.BlockSpec((1, rp, cout), lambda b: (b, 0, 0)),
            scratch_shapes=[pltpu.VMEM((rs, wd), jnp.float32)],
        ),
        compiler_params=pltpu.CompilerParams(
            dimension_semantics=("parallel",),
            vmem_limit_bytes=_VMEM_LIMIT,
        ),
    )(xpf, mask, blk["w1"], blk["s1"], blk["b1"], blk["w2"], blk["s2"],
      blk["b2"], blk["w3"], blk["s3"], blk["b3"])


@jax.jit
def _fused_bottleneck_1x1(xc, blk):
    B, mc, cin = xc.shape
    wd = blk["w2"].shape[1]
    cout = blk["w3"].shape[1]
    assert cin == cout
    w2c = blk["w2"][4]  # center tap only: pad-1 3x3 on a 1x1 map
    return pl.pallas_call(
        fused_bottleneck_1x1_kernel,
        out_shape=jax.ShapeDtypeStruct((B, mc, cout), jnp.bfloat16),
        grid_spec=pltpu.PrefetchScalarGridSpec(
            num_scalar_prefetch=0,
            grid=(B,),
            in_specs=[
                pl.BlockSpec((1, mc, cin), lambda b: (b, 0, 0)),
                pl.BlockSpec((cin, wd), lambda b: (0, 0)),
                pl.BlockSpec((1, wd), lambda b: (0, 0)),
                pl.BlockSpec((1, wd), lambda b: (0, 0)),
                pl.BlockSpec((wd, wd), lambda b: (0, 0)),
                pl.BlockSpec((1, wd), lambda b: (0, 0)),
                pl.BlockSpec((1, wd), lambda b: (0, 0)),
                pl.BlockSpec((wd, cout), lambda b: (0, 0)),
                pl.BlockSpec((1, cout), lambda b: (0, 0)),
                pl.BlockSpec((1, cout), lambda b: (0, 0)),
            ],
            out_specs=pl.BlockSpec((1, mc, cout), lambda b: (b, 0, 0)),
        ),
        compiler_params=pltpu.CompilerParams(
            dimension_semantics=("parallel",),
            vmem_limit_bytes=_VMEM_LIMIT,
        ),
    )(xc, blk["w1"], blk["s1"], blk["b1"], w2c, blk["s2"], blk["b2"],
      blk["w3"], blk["s3"], blk["b3"])


# ----------------------------------------------------------------------------
# Layout converters (stage-boundary glue; everything stays bf16/channel-padded)
# ----------------------------------------------------------------------------
@jax.jit
def _to_padflat(x):
    B, H, W, C = x.shape
    wp, rp, _, _ = _spatial_cfg(H, W)
    xp = jnp.pad(x, ((0, 0), (1, 1), (1, 1), (0, 0)))
    flat = xp.reshape(B, (H + 2) * wp, C)
    if rp > (H + 2) * wp:
        flat = jnp.pad(flat, ((0, 0), (0, rp - (H + 2) * wp), (0, 0)))
    return flat


@functools.partial(jax.jit, static_argnames=("h", "w"))
def _from_padflat(xpf, *, h, w):
    B, _, C = xpf.shape
    wp = w + 2
    x = xpf[:, :(h + 2) * wp, :].reshape(B, h + 2, wp, C)
    return x[:, 1:1 + h, 1:1 + w, :]


@jax.jit
def _to_compact(x):
    B, H, W, C = x.shape
    mc = _round_up(H * W, 8)
    xc = x.reshape(B, H * W, C)
    if mc != H * W:
        xc = jnp.pad(xc, ((0, 0), (0, mc - H * W), (0, 0)))
    return xc


@functools.partial(jax.jit, static_argnames=("h", "w"))
def _from_compact(xc, *, h, w):
    B, _, C = xc.shape
    return xc[:, :h * w, :].reshape(B, h, w, C)


# ----------------------------------------------------------------------------
# Deterministic parameter construction (resnet152: bottleneck blocks [3,8,36,3])
# Weights are pre-packed to bf16 with both channel dims padded to multiples of
# 128 (zeros); BN is folded to (1, Np) f32 scale/bias at build time.
# ----------------------------------------------------------------------------
class ParamGen:
    def __init__(self, seed):
        self._key = jax.random.PRNGKey(seed)

    def _next(self):
        self._key, k = jax.random.split(self._key)
        return k

    def conv(self, kh, kw, cin, cout):
        std = 0.5 * (2.0 / (kh * kw * cin)) ** 0.5
        return std * jax.random.normal(self._next(), (kh, kw, cin, cout),
                                       jnp.float32)

    def bn(self, c):
        eps = 1e-5
        gamma = 1.0 + 0.1 * jax.random.normal(self._next(), (c,), jnp.float32)
        beta = 0.1 * jax.random.normal(self._next(), (c,), jnp.float32)
        mean = 0.1 * jax.random.normal(self._next(), (c,), jnp.float32)
        var = 1.0 + 0.1 * jax.random.uniform(self._next(), (c,), jnp.float32)
        scale = gamma * jax.lax.rsqrt(var + eps)
        bias = beta - mean * scale
        return scale, bias


def _pad_bn(scale, bias, cout_p):
    c = scale.shape[0]
    s = jnp.pad(scale, (0, cout_p - c)).reshape(1, cout_p)
    b = jnp.pad(bias, (0, cout_p - c)).reshape(1, cout_p)
    return s, b


def _prep(pg, k, cin, cout):
    """Pack a KxK conv + folded BN: weight -> (k*k, cin_p, cout_p) bf16 for
    k>1 or (cin_p, cout_p) bf16 for k==1; scale/bias -> (1, cout_p) f32."""
    w = pg.conv(k, k, cin, cout)
    scale, bias = pg.bn(cout)
    cin_p = _round_up(cin, 128)
    cout_p = _round_up(cout, 128)
    w = jnp.pad(w, ((0, 0), (0, 0), (0, cin_p - cin), (0, cout_p - cout)))
    wm = w.reshape(k * k, cin_p, cout_p).astype(jnp.bfloat16)
    if k == 1:
        wm = wm[0]
    s, b = _pad_bn(scale, bias, cout_p)
    return wm, s, b


def _prep_stem(pg):
    # 7x7, cin=3: keep cin unpadded, pad the im2col K (147) up to 256 instead.
    w = pg.conv(7, 7, 3, 64)
    scale, bias = pg.bn(64)
    wm = jnp.pad(w.reshape(147, 64), ((0, 256 - 147), (0, 128 - 64)))
    wm = wm.astype(jnp.bfloat16)
    s, b = _pad_bn(scale, bias, 128)
    return wm, s, b


def build_resnet152_params(seed=42):
    pg = ParamGen(seed)
    sw, ss, sb = _prep_stem(pg)
    params = {"stem_w": sw, "stem_s": ss, "stem_b": sb}
    layers_cfg = [(3, 64), (8, 128), (36, 256), (3, 512)]  # resnet152
    expansion = 4
    in_c = 64
    stages = []
    for nblocks, width in layers_cfg:
        out_c = width * expansion
        blocks = []
        for b in range(nblocks):
            w1, s1, b1 = _prep(pg, 1, in_c, width)
            w2, s2, b2 = _prep(pg, 3, width, width)
            w3, s3, b3 = _prep(pg, 1, width, out_c)
            blk = {"w1": w1, "s1": s1, "b1": b1,
                   "w2": w2, "s2": s2, "b2": b2,
                   "w3": w3, "s3": s3, "b3": b3}
            if b == 0:  # downsample branch (stride != 1 or channel change)
                wd, sd, bd = _prep(pg, 1, in_c, out_c)
                blk.update({"wd": wd, "sd": sd, "bd": bd})
            blocks.append(blk)
            in_c = out_c
        stages.append(blocks)
    params["stages"] = stages
    return params


# ----------------------------------------------------------------------------
# Forward pass
# ----------------------------------------------------------------------------
@jax.jit
def _stem_forward(x_nchw, stem_w, stem_s, stem_b):
    x = jnp.transpose(x_nchw, (0, 2, 3, 1)).astype(jnp.bfloat16)  # NCHW -> NHWC
    x = conv_im2col_bn(x, stem_w, stem_s, stem_b, ksize=7, stride=2, padding=3,
                       relu=True)
    return maxpool_3x3_s2_p1(x)


@functools.partial(jax.jit, static_argnames=("stride",))
def _downsample_bottleneck(x, blk, *, stride):
    """First block of every stage (has the 1x1 downsample branch)."""
    identity = conv1x1_bn(x, blk["wd"], blk["sd"], blk["bd"], stride=stride,
                          relu=False)
    out = conv1x1_bn(x, blk["w1"], blk["s1"], blk["b1"], relu=True)
    w2f = blk["w2"].reshape(-1, blk["w2"].shape[-1])
    out = conv_im2col_bn(out, w2f, blk["s2"], blk["b2"], ksize=3, stride=stride,
                         padding=1, relu=True)
    # conv3 fuses BN + residual add + ReLU in its Pallas epilogue
    out = conv1x1_bn(out, blk["w3"], blk["s3"], blk["b3"], relu=True,
                     residual=identity)
    return out


@jax.jit
def _head(x):
    pooled = global_avgpool(x)                 # (B, 2048) f32
    B, C = pooled.shape
    return pooled.reshape(B, C, 1, 1)          # match torch avgpool output


def bilinear_resnet152_forward(x_nchw, params):
    """x_nchw: (B, 3, H, W) float32 -> (B, 2048, 1, 1) float32 features."""
    x = _stem_forward(x_nchw, params["stem_w"], params["stem_s"],
                      params["stem_b"])                      # NHWC bf16
    for si, blocks in enumerate(params["stages"]):
        stride = 1 if si == 0 else 2
        x = _downsample_bottleneck(x, blocks[0], stride=stride)
        h, w = x.shape[1], x.shape[2]
        rest = blocks[1:]
        if not rest:
            continue
        if h == 1 and w == 1:
            xc = _to_compact(x)
            for blk in rest:
                xc = _fused_bottleneck_1x1(xc, blk)
            x = _from_compact(xc, h=h, w=w)
        else:
            xpf = _to_padflat(x)
            for blk in rest:
                xpf = _fused_bottleneck_spatial(xpf, blk, h=h, w=w)
            x = _from_padflat(xpf, h=h, w=w)
    out = _head(x)
    print(tuple(out.shape))                    # mirrors `print(x.size())`
    return out


# ----------------------------------------------------------------------------
if __name__ == "__main__":
    params = build_resnet152_params(seed=42)

    key = jax.random.PRNGKey(0)
    x = jax.random.normal(key, (2, 3, 32, 32), jnp.float32)  # small NCHW batch

    out = bilinear_resnet152_forward(x, params)
    out = jax.block_until_ready(out)

    assert out.shape == (2, 2048, 1, 1)
    assert bool(jnp.all(jnp.isfinite(out)))
    print("KERNEL_OK")
</pallas_src>

<mosaic_0001>
module attributes {stable_mosaic.version = 11 : i64} {
  func.func @matmul_bn_kernel(%arg0: i32, %arg1: i32, %arg2: memref<256x256xbf16, #tpu.memory_space<vmem>>, %arg3: memref<256x128xbf16, #tpu.memory_space<vmem>>, %arg4: memref<1x128xf32, #tpu.memory_space<vmem>>, %arg5: memref<1x128xf32, #tpu.memory_space<vmem>>, %arg6: memref<256x128xbf16, #tpu.memory_space<vmem>>) attributes {dimension_semantics = [#tpu.dimension_semantics<parallel>, #tpu.dimension_semantics<parallel>], iteration_bounds = array<i64: 2, 1>, scalar_prefetch = 0 : i64, scratch_operands = 0 : i64, tpu.core_type = #tpu.core_type<tc>, window_params = [{transform_indices = @transform_0, window_bounds = array<i64: 256, 256>}, {transform_indices = @transform_1, window_bounds = array<i64: 256, 128>}, {transform_indices = @transform_2, window_bounds = array<i64: 1, 128>}, {transform_indices = @transform_3, window_bounds = array<i64: 1, 128>}, {transform_indices = @transform_4, window_bounds = array<i64: 256, 128>}]} {
    %c0 = arith.constant 0 : index
    %c0_0 = arith.constant 0 : index
    %0 = vector.load %arg2[%c0, %c0_0] : memref<256x256xbf16, #tpu.memory_space<vmem>>, vector<256x256xbf16>
    %c0_1 = arith.constant 0 : index
    %c0_2 = arith.constant 0 : index
    %1 = vector.load %arg3[%c0_1, %c0_2] : memref<256x128xbf16, #tpu.memory_space<vmem>>, vector<256x128xbf16>
    %cst = arith.constant dense<0.000000e+00> : vector<256x128xf32>
    %2 = tpu.matmul %0, %1, %cst {dimension_numbers = #tpu.dot_dimension_numbers<[1], [0], [0], [1], [0, 0, 1, 1], [], []>} : vector<256x256xbf16>, vector<256x128xbf16>, vector<256x128xf32> -> vector<256x128xf32>
    %c0_3 = arith.constant 0 : index
    %c0_4 = arith.constant 0 : index
    %3 = vector.load %arg4[%c0_3, %c0_4] : memref<1x128xf32, #tpu.memory_space<vmem>>, vector<1x128xf32>
    %4 = vector.broadcast %3 : vector<1x128xf32> to vector<256x128xf32>
    %5 = arith.mulf %2, %4 : vector<256x128xf32>
    %c0_5 = arith.constant 0 : index
    %c0_6 = arith.constant 0 : index
    %6 = vector.load %arg5[%c0_5, %c0_6] : memref<1x128xf32, #tpu.memory_space<vmem>>, vector<1x128xf32>
    %7 = vector.broadcast %6 : vector<1x128xf32> to vector<256x128xf32>
    %8 = arith.addf %5, %7 : vector<256x128xf32>
    %cst_7 = arith.constant 0.000000e+00 : f32
    %9 = vector.broadcast %cst_7 : f32 to vector<256x128xf32>
    %10 = arith.maximumf %8, %9 : vector<256x128xf32>
    %11 = arith.truncf %10 : vector<256x128xf32> to vector<256x128xbf16>
    %c0_8 = arith.constant 0 : index
    %c0_9 = arith.constant 0 : index
    %12 = vector.load %arg6[%c0_8, %c0_9] : memref<256x128xbf16, #tpu.memory_space<vmem>>, vector<256x128xbf16>
    tpu.vector_store %arg6[%c0_8, %c0_9], %11 {strides = array<i32>} : memref<256x128xbf16, #tpu.memory_space<vmem>>, vector<256x128xbf16>,
    return
  }
  func.func @transform_0(%arg0: i32, %arg1: i32) -> (i32, i32) {
    %c0_i32 = arith.constant 0 : i32
    %c0_i32_0 = arith.constant 0 : i32
    return %arg0, %c0_i32 : i32, i32
  }
  func.func @transform_1(%arg0: i32, %arg1: i32) -> (i32, i32) {
    %c0_i32 = arith.constant 0 : i32
    %c0_i32_0 = arith.constant 0 : i32
    return %c0_i32, %arg1 : i32, i32
  }
  func.func @transform_2(%arg0: i32, %arg1: i32) -> (i32, i32) {
    %c0_i32 = arith.constant 0 : i32
    %c0_i32_0 = arith.constant 0 : i32
    return %c0_i32, %arg1 : i32, i32
  }
  func.func @transform_3(%arg0: i32, %arg1: i32) -> (i32, i32) {
    %c0_i32 = arith.constant 0 : i32
    %c0_i32_0 = arith.constant 0 : i32
    return %c0_i32, %arg1 : i32, i32
  }
  func.func @transform_4(%arg0: i32, %arg1: i32) -> (i32, i32) {
    %c0_i32 = arith.constant 0 : i32
    return %arg0, %arg1 : i32, i32
  }
}

module attributes {stable_mosaic.version = 11 : i64} {
  func.func @max_reduce_kernel(%arg0: i32, %arg1: memref<9x128x128xbf16, #tpu.memory_space<vmem>>, %arg2: memref<128x128xbf16, #tpu.memory_space<vmem>>) attributes {dimension_semantics = [#tpu.dimension_semantics<parallel>], iteration_bounds = array<i64: 1>, scalar_prefetch = 0 : i64, scratch_operands = 0 : i64, tpu.core_type = #tpu.core_type<tc>, window_params = [{transform_indices = @transform_0, window_bounds = array<i64: 9, 128, 128>}, {transform_indices = @transform_1, window_bounds = array<i64: 128, 128>}]} {
    %c0 = arith.constant 0 : index
    %c0_0 = arith.constant 0 : index
    %c0_1 = arith.constant 0 : index
    %0 = vector.load %arg1[%c0, %c0_0, %c0_1] : memref<9x128x128xbf16, #tpu.memory_space<vmem>>, vector<9x128x128xbf16>
    %cst = arith.constant dense<0xFF80> : vector<128x128xbf16>
    %1 = vector.multi_reduction <maximumf>, %0, %cst [0] : vector<9x128x128xbf16> to vector<128x128xbf16>
    %c0_2 = arith.constant 0 : index
    %c0_3 = arith.constant 0 : index
    %2 = vector.load %arg2[%c0_2, %c0_3] : memref<128x128xbf16, #tpu.memory_space<vmem>>, vector<128x128xbf16>
    tpu.vector_store %arg2[%c0_2, %c0_3], %1 {strides = array<i32>} : memref<128x128xbf16, #tpu.memory_space<vmem>>, vector<128x128xbf16>,
    return
  }
  func.func @transform_0(%arg0: i32) -> (i32, i32, i32) {
    %c0_i32 = arith.constant 0 : i32
    %c0_i32_0 = arith.constant 0 : i32
    %c0_i32_1 = arith.constant 0 : i32
    return %c0_i32, %arg0, %c0_i32_0 : i32, i32, i32
  }
  func.func @transform_1(%arg0: i32) -> (i32, i32) {
    %c0_i32 = arith.constant 0 : i32
    %c0_i32_0 = arith.constant 0 : i32
    return %arg0, %c0_i32 : i32, i32
  }
}

</mosaic_0001>

<llo_original>
// kernel: _stem_forward.2
$region0: #{_stem_forward.2}
  #allocation0 [shape = 'u32[]', space=smem, size = 0x4, offset = 0x4, fixed_abs, tag = 'smem constant byte address 0x4 - core index']
  #allocation1 [shape = 'u32[72,128]{1,0:T(1,128)}', space=vmem, size = 0x9000, scoped, tag = 'internal scratch']
  %s0 = inlined_call_operand.vmem [shape: bf16[512,256], index: 0, kind: input, shape index: {}]
  %s1 = inlined_call_operand.vmem [shape: bf16[256,128], index: 1, kind: input, shape index: {}]
  %s2 = inlined_call_operand.vmem [shape: f32[1,128], index: 2, kind: input, shape index: {}]
  %s3 = inlined_call_operand.vmem [shape: f32[1,128], index: 3, kind: input, shape index: {}]
  %s4 = inlined_call_operand.vmem [shape: bf16[512,128], index: 4, kind: output, shape index: {}]
  %s5 = sld [smem:[#allocation0]]
  $region49: #{_stem_forward.2} parent=0
    _
  %s7 = ssub.s32 1, %s5
  %s8 = scalar_select 0, %s7, %s5
  loop: start=0, step=1, limit=4
  $region2: #{_stem_forward.2} parent=0 // loop_pre_header
    _
  $region3: #{_stem_forward.2} parent=0 // loop_header
    %s10 = sphi 0, %s14
    %p11 = scmp.ge.s32.totalorder %s10, 4
    %s17 = sphi 0, %s29
    %s18 = sphi 0, %s25
    %s19 = sphi 0, %s17
    %s20 = sphi 0, %s18
    %s21 = sphi 0, %s19
    %s22 = sphi 0, %s20
    %s32 = sphi 0, %s34
    %s35 = sphi 0, %s32
    %s36 = sphi 0, %s35
    %s52 = sphi 0, %s36
    %s58 = sphi 0, %s60
    %s61 = sphi 0, %s58
    %s62 = sphi 0, %s61
    %s78 = sphi 0, %s62
    %s84 = sphi 0, %s86
    %s87 = sphi 0, %s84
    %s88 = sphi 0, %s87
    %s104 = sphi 0, %s88
    %s110 = sphi 0, %s112
    %s113 = sphi 0, %s110
    %s114 = sphi 0, %s113
    %s130 = sphi 0, %s114
    %s138 = sphi 0, %s140
    %s141 = sphi 0, %s138
    %s142 = sphi 0, %s141
    %s158 = sphi 0, %s142
  $region4: #{_stem_forward.2} parent=0 // loop_header_branch
    %13 = sbr.rel (%p11) target = $region8
  $region5: #{_stem_forward.2} parent=0 // loop_body
    %s15 = ssub.s32 %s10, 1
    %s16 = ssub.s32 %s10, 2
    %s23 = sadd.s32 1, %s18
    %p24 = scmp.ge.s32.totalorder %s23, 1
    %s25 = scalar_select %p24, 0, %s23
    %s26 = sadd.s32 1, %s17
    %s27 = scalar_select %p24, %s26, %s17
    %p28 = scmp.ge.s32.totalorder %s27, 2
    %s29 = scalar_select %p28, 0, %s27
    %s30 = ssub.s32 %s17, %s29
    %p31 = scmp.eq.s32.totalorder %s30, 0
    %s33 = sadd.s32 %s32, 1
    %s34 = scalar_select %p31, %s32, %s33
    %p37 = pneg %p31
    %p38 = scmp.eq.s32.totalorder %s10, 1
    %p39 = por %p37, %p38
    %p40 = scmp.ne.s32.totalorder %s32, %s35
    %p41 = scmp.eq.s32.totalorder %s10, 0
    %p42 = por %p40, %p41
    %p43 = scmp.ne.s32.totalorder %s32, %s35
    %p44 = scmp.eq.s32.totalorder %s15, 1
    %p45 = por %p43, %p44
    %p46 = scmp.ne.s32.totalorder %s35, %s36
    %p47 = scmp.eq.s32.totalorder %s15, 0
    %p48 = por %p46, %p47
    %p49 = scmp.ne.s32.totalorder %s35, %s36
    %p50 = scmp.eq.s32.totalorder %s16, 1
    %p51 = por %p49, %p50
    %p53 = scmp.ne.s32.totalorder %s36, %s52
    %p54 = scmp.eq.s32.totalorder %s16, 0
    %p55 = por %p53, %p54
    %s56 = ssub.s32 %s18, %s25
    %p57 = scmp.eq.s32.totalorder %s56, 0
    %s59 = sadd.s32 %s58, 1
    %s60 = scalar_select %p57, %s58, %s59
    %p63 = pneg %p57
    %p64 = scmp.eq.s32.totalorder %s10, 1
    %p65 = por %p63, %p64
    %p66 = scmp.ne.s32.totalorder %s58, %s61
    %p67 = scmp.eq.s32.totalorder %s10, 0
    %p68 = por %p66, %p67
    %p69 = scmp.ne.s32.totalorder %s58, %s61
    %p70 = scmp.eq.s32.totalorder %s15, 1
    %p71 = por %p69, %p70
    %p72 = scmp.ne.s32.totalorder %s61, %s62
    %p73 = scmp.eq.s32.totalorder %s15, 0
    %p74 = por %p72, %p73
    %p75 = scmp.ne.s32.totalorder %s61, %s62
    %p76 = scmp.eq.s32.totalorder %s16, 1
    %p77 = por %p75, %p76
    %p79 = scmp.ne.s32.totalorder %s62, %s78
    %p80 = scmp.eq.s32.totalorder %s16, 0
    %p81 = por %p79, %p80
    %s82 = ssub.s32 %s18, %s25
    %p83 = scmp.eq.s32.totalorder %s82, 0
    %s85 = sadd.s32 %s84, 1
    %s86 = scalar_select %p83, %s84, %s85
    %p89 = pneg %p83
    %p90 = scmp.eq.s32.totalorder %s10, 1
    %p91 = por %p89, %p90
    %p92 = scmp.ne.s32.totalorder %s84, %s87
    %p93 = scmp.eq.s32.totalorder %s10, 0
    %p94 = por %p92, %p93
    %p95 = scmp.ne.s32.totalorder %s84, %s87
    %p96 = scmp.eq.s32.totalorder %s15, 1
    %p97 = por %p95, %p96
    %p98 = scmp.ne.s32.totalorder %s87, %s88
    %p99 = scmp.eq.s32.totalorder %s15, 0
    %p100 = por %p98, %p99
    %p101 = scmp.ne.s32.totalorder %s87, %s88
    %p102 = scmp.eq.s32.totalorder %s16, 1
    %p103 = por %p101, %p102
    %p105 = scmp.ne.s32.totalorder %s88, %s104
    %p106 = scmp.eq.s32.totalorder %s16, 0
    %p107 = por %p105, %p106
    %s108 = ssub.s32 %s18, %s25
    %p109 = scmp.eq.s32.totalorder %s108, 0
    %s111 = sadd.s32 %s110, 1
    %s112 = scalar_select %p109, %s110, %s111
    %p115 = pneg %p109
    %p116 = scmp.eq.s32.totalorder %s10, 1
    %p117 = por %p115, %p116
    %p118 = scmp.ne.s32.totalorder %s110, %s113
    %p119 = scmp.eq.s32.totalorder %s10, 0
    %p120 = por %p118, %p119
    %p121 = scmp.ne.s32.totalorder %s110, %s113
    %p122 = scmp.eq.s32.totalorder %s15, 1
    %p123 = por %p121, %p122
    %p124 = scmp.ne.s32.totalorder %s113, %s114
    %p125 = scmp.eq.s32.totalorder %s15, 0
    %p126 = por %p124, %p125
    %p127 = scmp.ne.s32.totalorder %s113, %s114
    %p128 = scmp.eq.s32.totalorder %s16, 1
    %p129 = por %p127, %p128
    %p131 = scmp.ne.s32.totalorder %s114, %s130
    %p132 = scmp.eq.s32.totalorder %s16, 0
    %p133 = por %p131, %p132
    %s134 = ssub.s32 %s17, %s29
    %s135 = ssub.s32 %s18, %s25
    %s136 = sor.u32 %s134, %s135
    %p137 = scmp.eq.s32.totalorder %s136, 0
    %s139 = sadd.s32 %s138, 1
    %s140 = scalar_select %p137, %s138, %s139
    %p143 = pneg %p137
    %p144 = scmp.eq.s32.totalorder %s10, 1
    %p145 = por %p143, %p144
    %p146 = scmp.ne.s32.totalorder %s138, %s141
    %p147 = scmp.eq.s32.totalorder %s10, 0
    %p148 = por %p146, %p147
    %p149 = scmp.ne.s32.totalorder %s138, %s141
    %p150 = scmp.eq.s32.totalorder %s15, 1
    %p151 = por %p149, %p150
    %p152 = scmp.ne.s32.totalorder %s141, %s142
    %p153 = scmp.eq.s32.totalorder %s15, 0
    %p154 = por %p152, %p153
    %p155 = scmp.ne.s32.totalorder %s141, %s142
    %p156 = scmp.eq.s32.totalorder %s16, 1
    %p157 = por %p155, %p156
    %p159 = scmp.ne.s32.totalorder %s142, %s158
    %p160 = scmp.eq.s32.totalorder %s16, 0
    %p161 = por %p159, %p160
    %p162 = scmp.le.s32.totalorder 1, %s10
    %p163 = scmp.lt.s32.totalorder %s10, 3
    %p164 = pnand %p162, %p163
    %p165 = pneg %p164
    // Predicated region
    $region9: #{_stem_forward.2} parent=5 // pred_check
      _
    $region10: #{_stem_forward.2} parent=5 // pred_check_branch
      %167 = sbr.rel (%p164) target = $region12
    $region11: #{_stem_forward.2} parent=5 // pred_region
      %s168 = ssub.s32 %s10, 1
      // Predicated region
      $region13: #{_stem_forward.2} parent=11 // pred_check
        %p169 = pneg %p74
      $region14: #{_stem_forward.2} parent=11 // pred_check_branch
        %171 = sbr.rel (%p169) target = $region16
      $region15: #{_stem_forward.2} parent=11 // pred_region
        %p172 = scmp.lt.s32.totalorder %s20, 0
        %s173 = scalar_select %p172, %s20, 0
        %s174 = smul.addr %s173, 4
        %s175 = scalar_lea.vmem %s1, %s174
      $region16: #{_stem_forward.2} parent=11 // pred_fallthru
        _
      // Predicated region
      $region17: #{_stem_forward.2} parent=11 // pred_check
        %p176 = pneg %p100
      $region18: #{_stem_forward.2} parent=11 // pred_check_branch
        %178 = sbr.rel (%p176) target = $region20
      $region19: #{_stem_forward.2} parent=11 // pred_region
        %p179 = scmp.lt.s32.totalorder %s20, 0
        %s180 = scalar_select %p179, %s20, 0
        %s181 = scalar_lea.vmem %s2, %s180
      $region20: #{_stem_forward.2} parent=11 // pred_fallthru
        _
      // Predicated region
      $region21: #{_stem_forward.2} parent=11 // pred_check
        %p182 = pneg %p126
      $region22: #{_stem_forward.2} parent=11 // pred_check_branch
        %184 = sbr.rel (%p182) target = $region24
      $region23: #{_stem_forward.2} parent=11 // pred_region
        %p185 = scmp.lt.s32.totalorder %s20, 0
        %s186 = scalar_select %p185, %s20, 0
        %s187 = scalar_lea.vmem %s3, %s186
      $region24: #{_stem_forward.2} parent=11 // pred_fallthru
        _
    $region12: #{_stem_forward.2} parent=5 // pred_fallthru
      _
    %p188 = scmp.lt.s32.totalorder %s10, 2
    // Predicated region
    $region25: #{_stem_forward.2} parent=5 // pred_check
      %p189 = pneg %p188
    $region26: #{_stem_forward.2} parent=5 // pred_check_branch
      %191 = sbr.rel (%p189) target = $region28
    $region27: #{_stem_forward.2} parent=5 // pred_region
      // Predicated region
      $region29: #{_stem_forward.2} parent=27 // pred_check
        %p192 = pneg %p42
      $region30: #{_stem_forward.2} parent=27 // pred_check_branch
        %194 = sbr.rel (%p192) target = $region32
      $region31: #{_stem_forward.2} parent=27 // pred_region
        %s195 = smul.u32 32, %s17
        %p196 = scmp.lt.s32.totalorder %s195, 63
        %s197 = scalar_select %p196, %s195, 63
        %s198 = smul.addr %s197, 2
        %s199 = smul.addr %s198, 4
        %s200 = scalar_lea.vmem %s0, %s199
        %s201 = smul.u32 32, %s17
      $region32: #{_stem_forward.2} parent=27 // pred_fallthru
        _
    $region28: #{_stem_forward.2} parent=5 // pred_fallthru
      _
    %p202 = scmp.le.s32.totalorder 1, %s10
    %p203 = scmp.lt.s32.totalorder %s10, 3
    %p204 = pnand %p202, %p203
    %p205 = pneg %p204
    // Predicated region
    $region33: #{_stem_forward.2} parent=5 // pred_check
      _
    $region34: #{_stem_forward.2} parent=5 // pred_check_branch
      %207 = sbr.rel (%p204) target = $region36
    $region35: #{_stem_forward.2} parent=5 // pred_region
      %s208 = ssub.s32 %s10, 1
      %s209 = smul.u32 32, %s19
      %p210 = scmp.lt.s32.totalorder %s209, 63
      %s211 = scalar_select %p210, %s209, 63
      %s212 = smul.addr %s211, 2
      %s213 = smul.addr %s212, 4
      %s214 = scalar_lea.vmem %s0, %s213
      %p215 = pneg %p48
      %p216 = pneg %p45
      %p217 = scmp.lt.s32.totalorder %s20, 0
      %s218 = scalar_select %p217, %s20, 0
      %s219 = smul.addr %s218, 4
      %s220 = scalar_lea.vmem %s1, %s219
      %p221 = pneg %p74
      %p222 = pneg %p71
      %p223 = scmp.lt.s32.totalorder %s20, 0
      %s224 = scalar_select %p223, %s20, 0
      %s225 = scalar_lea.vmem %s2, %s224
      %p226 = pneg %p100
      %p227 = pneg %p97
      %p228 = scmp.lt.s32.totalorder %s20, 0
      %s229 = scalar_select %p228, %s20, 0
      %s230 = scalar_lea.vmem %s3, %s229
      %p231 = pneg %p126
      %p232 = pneg %p123
      %p233 = pneg %p154
      %p234 = pneg %p151
      %s235 = smul.u32 32, %s19
      %p236 = scmp.lt.s32.totalorder %s235, 63
      %s237 = scalar_select %p236, %s235, 63
      %p238 = scmp.lt.s32.totalorder %s20, 0
      %s239 = scalar_select %p238, %s20, 0
      %s240 = sadd.s32 %s239, %s237
      %s241 = smul.addr %s240, 4
      %s242 = scalar_lea.vmem %s4, %s241
      %s243 = smul.u32 32, %s19
      %p244 = scmp.lt.s32.totalorder %s243, 63
      %s245 = scalar_select %p244, %s243, 63
      %s246 = smul.addr %s245, 2
      %s247 = smul.addr %s246, 4
      %s248 = scalar_lea.vmem %s0, %s247
      %s249 = smul.u32 32, %s19
      %p250 = scmp.lt.s32.totalorder %s20, 0
      %s251 = scalar_select %p250, %s20, 0
      %s252 = smul.addr %s251, 4
      %s253 = scalar_lea.vmem %s1, %s252
      %p254 = scmp.lt.s32.totalorder %s20, 0
      %s255 = scalar_select %p254, %s20, 0
      %s256 = scalar_lea.vmem %s2, %s255
      %p257 = scmp.lt.s32.totalorder %s20, 0
      %s258 = scalar_select %p257, %s20, 0
      %s259 = scalar_lea.vmem %s3, %s258
      %s260 = smul.u32 32, %s19
      %p261 = scmp.lt.s32.totalorder %s260, 63
      %s262 = scalar_select %p261, %s260, 63
      %p263 = scmp.lt.s32.totalorder %s20, 0
      %s264 = scalar_select %p263, %s20, 0
      %s265 = sadd.s32 %s264, %s262
      %s266 = smul.addr %s265, 4
      %s267 = scalar_lea.vmem %s4, %s266
      %s268 = smul.u32 32, %s19
      %v269 = vld [vmem:[%s248] sm:$0xff]
      %v270 = vld [vmem:[%s248 + $0x8] sm:$0xff]
      %v271 = vld [vmem:[%s248 + $0x10] sm:$0xff]
      %v272 = vld [vmem:[%s248 + $0x18] sm:$0xff]
      %v273 = vld [vmem:[%s248 + $0x20] sm:$0xff]
      %v274 = vld [vmem:[%s248 + $0x28] sm:$0xff]
      %v275 = vld [vmem:[%s248 + $0x30] sm:$0xff]
      %v276 = vld [vmem:[%s248 + $0x38] sm:$0xff]
      %v277 = vld [vmem:[%s248 + $0x40] sm:$0xff]
      %v278 = vld [vmem:[%s248 + $0x48] sm:$0xff]
      %v279 = vld [vmem:[%s248 + $0x50] sm:$0xff]
      %v280 = vld [vmem:[%s248 + $0x58] sm:$0xff]
      %v281 = vld [vmem:[%s248 + $0x60] sm:$0xff]
      %v282 = vld [vmem:[%s248 + $0x68] sm:$0xff]
      %v283 = vld [vmem:[%s248 + $0x70] sm:$0xff]
      %v284 = vld [vmem:[%s248 + $0x78] sm:$0xff]
      %v285 = vld [vmem:[%s248 + $0x80] sm:$0xff]
      %v286 = vld [vmem:[%s248 + $0x88] sm:$0xff]
      %v287 = vld [vmem:[%s248 + $0x90] sm:$0xff]
      %v288 = vld [vmem:[%s248 + $0x98] sm:$0xff]
      %v289 = vld [vmem:[%s248 + $0xa0] sm:$0xff]
      %v290 = vld [vmem:[%s248 + $0xa8] sm:$0xff]
      %v291 = vld [vmem:[%s248 + $0xb0] sm:$0xff]
      %v292 = vld [vmem:[%s248 + $0xb8] sm:$0xff]
      %v293 = vld [vmem:[%s248 + $0xc0] sm:$0xff]
      %v294 = vld [vmem:[%s248 + $0xc8] sm:$0xff]
      %v295 = vld [vmem:[%s248 + $0xd0] sm:$0xff]
      %v296 = vld [vmem:[%s248 + $0xd8] sm:$0xff]
      %v297 = vld [vmem:[%s248 + $0xe0] sm:$0xff]
      %v298 = vld [vmem:[%s248 + $0xe8] sm:$0xff]
      %v299 = vld [vmem:[%s248 + $0xf0] sm:$0xff]
      %v300 = vld [vmem:[%s248 + $0xf8] sm:$0xff]
      %v301 = vld [vmem:[%s253] sm:$0xf]
      %v302 = vld [vmem:[%s253 + $0x4] sm:$0xf]
      %v303 = vld [vmem:[%s253 + $0x8] sm:$0xf]
      %v304 = vld [vmem:[%s253 + $0xc] sm:$0xf]
      %v305 = vld [vmem:[%s253 + $0x10] sm:$0xf]
      %v306 = vld [vmem:[%s253 + $0x14] sm:$0xf]
      %v307 = vld [vmem:[%s253 + $0x18] sm:$0xf]
      %v308 = vld [vmem:[%s253 + $0x1c] sm:$0xf]
      %v309 = vld [vmem:[%s253 + $0x20] sm:$0xf]
      %v310 = vld [vmem:[%s253 + $0x24] sm:$0xf]
      %v311 = vld [vmem:[%s253 + $0x28] sm:$0xf]
      %v312 = vld [vmem:[%s253 + $0x2c] sm:$0xf]
      %v313 = vld [vmem:[%s253 + $0x30] sm:$0xf]
      %v314 = vld [vmem:[%s253 + $0x34] sm:$0xf]
      %v315 = vld [vmem:[%s253 + $0x38] sm:$0xf]
      %v316 = vld [vmem:[%s253 + $0x3c] sm:$0xf]
      %v317 = vld [vmem:[%s253 + $0x40] sm:$0xf]
      %v318 = vld [vmem:[%s253 + $0x44] sm:$0xf]
      %v319 = vld [vmem:[%s253 + $0x48] sm:$0xf]
      %v320 = vld [vmem:[%s253 + $0x4c] sm:$0xf]
      %v321 = vld [vmem:[%s253 + $0x50] sm:$0xf]
      %v322 = vld [vmem:[%s253 + $0x54] sm:$0xf]
      %v323 = vld [vmem:[%s253 + $0x58] sm:$0xf]
      %v324 = vld [vmem:[%s253 + $0x5c] sm:$0xf]
      %v325 = vld [vmem:[%s253 + $0x60] sm:$0xf]
      %v326 = vld [vmem:[%s253 + $0x64] sm:$0xf]
      %v327 = vld [vmem:[%s253 + $0x68] sm:$0xf]
      %v328 = vld [vmem:[%s253 + $0x6c] sm:$0xf]
      %v329 = vld [vmem:[%s253 + $0x70] sm:$0xf]
      %v330 = vld [vmem:[%s253 + $0x74] sm:$0xf]
      %v331 = vld [vmem:[%s253 + $0x78] sm:$0xf]
      %v332 = vld [vmem:[%s253 + $0x7c] sm:$0xf]
      %v365 = vunpack.c.l.b16 %v269
      %v366 = vunpack.c.h.b16 %v269
      %v367 = vunpack.c.l.b16 %v270
      %v368 = vunpack.c.h.b16 %v270
      %v369 = vunpack.c.l.b16 %v271
      %v370 = vunpack.c.h.b16 %v271
      %v371 = vunpack.c.l.b16 %v272
      %v372 = vunpack.c.h.b16 %v272
      %v373 = vunpack.c.l.b16 %v273
      %v374 = vunpack.c.h.b16 %v273
      %v375 = vunpack.c.l.b16 %v274
      %v376 = vunpack.c.h.b16 %v274
      %v377 = vunpack.c.l.b16 %v275
      %v378 = vunpack.c.h.b16 %v275
      %v379 = vunpack.c.l.b16 %v276
      %v380 = vunpack.c.h.b16 %v276
      %v381 = vunpack.c.l.b16 %v277
      %v382 = vunpack.c.h.b16 %v277
      %v383 = vunpack.c.l.b16 %v278
      %v384 = vunpack.c.h.b16 %v278
      %v385 = vunpack.c.l.b16 %v279
      %v386 = vunpack.c.h.b16 %v279
      %v387 = vunpack.c.l.b16 %v280
      %v388 = vunpack.c.h.b16 %v280
      %v389 = vunpack.c.l.b16 %v281
      %v390 = vunpack.c.h.b16 %v281
      %v391 = vunpack.c.l.b16 %v282
      %v392 = vunpack.c.h.b16 %v282
      %v393 = vunpack.c.l.b16 %v283
      %v394 = vunpack.c.h.b16 %v283
      %v395 = vunpack.c.l.b16 %v284
      %v396 = vunpack.c.h.b16 %v284
      %v397 = vunpack.c.l.b16 %v285
      %v398 = vunpack.c.h.b16 %v285
      %v399 = vunpack.c.l.b16 %v286
      %v400 = vunpack.c.h.b16 %v286
      %v401 = vunpack.c.l.b16 %v287
      %v402 = vunpack.c.h.b16 %v287
      %v403 = vunpack.c.l.b16 %v288
      %v404 = vunpack.c.h.b16 %v288
      %v405 = vunpack.c.l.b16 %v289
      %v406 = vunpack.c.h.b16 %v289
      %v407 = vunpack.c.l.b16 %v290
      %v408 = vunpack.c.h.b16 %v290
      %v409 = vunpack.c.l.b16 %v291
      %v410 = vunpack.c.h.b16 %v291
      %v411 = vunpack.c.l.b16 %v292
      %v412 = vunpack.c.h.b16 %v292
      %v413 = vunpack.c.l.b16 %v293
      %v414 = vunpack.c.h.b16 %v293
      %v415 = vunpack.c.l.b16 %v294
      %v416 = vunpack.c.h.b16 %v294
      %v417 = vunpack.c.l.b16 %v295
      %v418 = vunpack.c.h.b16 %v295
      %v419 = vunpack.c.l.b16 %v296
      %v420 = vunpack.c.h.b16 %v296
      %v421 = vunpack.c.l.b16 %v297
      %v422 = vunpack.c.h.b16 %v297
      %v423 = vunpack.c.l.b16 %v298
      %v424 = vunpack.c.h.b16 %v298
      %v425 = vunpack.c.l.b16 %v299
      %v426 = vunpack.c.h.b16 %v299
      %v427 = vunpack.c.l.b16 %v300
      %v428 = vunpack.c.h.b16 %v300
      %v429 = vpack.c.b16 %v367, %v365
      %v430 = vpack.c.b16 %v368, %v366
      %v431 = vpack.c.b16 %v371, %v369
      %v432 = vpack.c.b16 %v372, %v370
      %v433 = vpack.c.b16 %v375, %v373
      %v434 = vpack.c.b16 %v376, %v374
      %v435 = vpack.c.b16 %v379, %v377
      %v436 = vpack.c.b16 %v380, %v378
      %v437 = vpack.c.b16 %v383, %v381
      %v438 = vpack.c.b16 %v384, %v382
      %v439 = vpack.c.b16 %v387, %v385
      %v440 = vpack.c.b16 %v388, %v386
      %v441 = vpack.c.b16 %v391, %v389
      %v442 = vpack.c.b16 %v392, %v390
      %v443 = vpack.c.b16 %v395, %v393
      %v444 = vpack.c.b16 %v396, %v394
      %v445 = vpack.c.b16 %v399, %v397
      %v446 = vpack.c.b16 %v400, %v398
      %v447 = vpack.c.b16 %v403, %v401
      %v448 = vpack.c.b16 %v404, %v402
      %v449 = vpack.c.b16 %v407, %v405
      %v450 = vpack.c.b16 %v408, %v406
      %v451 = vpack.c.b16 %v411, %v409
      %v452 = vpack.c.b16 %v412, %v410
      %v453 = vpack.c.b16 %v415, %v413
      %v454 = vpack.c.b16 %v416, %v414
      %v455 = vpack.c.b16 %v419, %v417
      %v456 = vpack.c.b16 %v420, %v418
      %v457 = vpack.c.b16 %v423, %v421
      %v458 = vpack.c.b16 %v424, %v422
      %v459 = vpack.c.b16 %v427, %v425
      %v460 = vpack.c.b16 %v428, %v426
      %v525 = vunpack.c.l.b16 %v301
      %v526 = vunpack.c.l.b16 %v302
      %v527 = vunpack.c.l.b16 %v303
      %v528 = vunpack.c.l.b16 %v304
      %v529 = vunpack.c.l.b16 %v305
      %v530 = vunpack.c.l.b16 %v306
      %v531 = vunpack.c.l.b16 %v307
      %v532 = vunpack.c.l.b16 %v308
      %v533 = vunpack.c.l.b16 %v309
      %v534 = vunpack.c.l.b16 %v310
      %v535 = vunpack.c.l.b16 %v311
      %v536 = vunpack.c.l.b16 %v312
      %v537 = vunpack.c.l.b16 %v313
      %v538 = vunpack.c.l.b16 %v314
      %v539 = vunpack.c.l.b16 %v315
      %v540 = vunpack.c.l.b16 %v316
      %v541 = vunpack.c.l.b16 %v317
      %v542 = vunpack.c.l.b16 %v318
      %v543 = vunpack.c.l.b16 %v319
      %v544 = vunpack.c.l.b16 %v320
      %v545 = vunpack.c.l.b16 %v321
      %v546 = vunpack.c.l.b16 %v322
      %v547 = vunpack.c.l.b16 %v323
      %v548 = vunpack.c.l.b16 %v324
      %v549 = vunpack.c.l.b16 %v325
      %v550 = vunpack.c.l.b16 %v326
      %v551 = vunpack.c.l.b16 %v327
      %v552 = vunpack.c.l.b16 %v328
      %v553 = vunpack.c.l.b16 %v329
      %v554 = vunpack.c.l.b16 %v330
      %v555 = vunpack.c.l.b16 %v331
      %v556 = vunpack.c.l.b16 %v332
      %v557 = vpack.c.b16 %v526, %v525
      %v558 = vpack.c.b16 %v528, %v527
      %v559 = vpack.c.b16 %v530, %v529
      %v560 = vpack.c.b16 %v532, %v531
      %v561 = vpack.c.b16 %v534, %v533
      %v562 = vpack.c.b16 %v536, %v535
      %v563 = vpack.c.b16 %v538, %v537
      %v564 = vpack.c.b16 %v540, %v539
      %v565 = vpack.c.b16 %v542, %v541
      %v566 = vpack.c.b16 %v544, %v543
      %v567 = vpack.c.b16 %v546, %v545
      %v568 = vpack.c.b16 %v548, %v547
      %v569 = vpack.c.b16 %v550, %v549
      %v570 = vpack.c.b16 %v552, %v551
      %v571 = vpack.c.b16 %v554, %v553
      %v572 = vpack.c.b16 %v556, %v555
      %589 = vmatpush.bf16.msra.mxu0 %v564
      %590 = vmatpush.bf16.msra.mxu0 %v563
      %591 = vmatpush.bf16.msra.mxu0 %v562
      %592 = vmatpush.bf16.msra.mxu0 %v561
      %593 = vmatpush.bf16.msra.mxu0 %v560
      %594 = vmatpush.bf16.msra.mxu0 %v559
      %595 = vmatpush.bf16.msra.mxu0 %v558
      %596 = vmatpush.bf16.msra.mxu0 %v557
      %597 = vmatmul.bf16.gmra.mxu0 %v429
      %v598 = vpop.f32.mrf.mxu0
      %v599 = vadd.f32 0.0, %v598
      %v600 = vpop.f32.mrf.mxu0
      %v601 = vadd.f32 0.0, %v600
      %602 = vmatmul.bf16.gmra.mxu0 %v431
      %v603 = vpop.f32.mrf.mxu0
      %v604 = vadd.f32 0.0, %v603
      %v605 = vpop.f32.mrf.mxu0
      %v606 = vadd.f32 0.0, %v605
      %607 = vmatmul.bf16.gmra.mxu0 %v433
      %v608 = vpop.f32.mrf.mxu0
      %v609 = vadd.f32 0.0, %v608
      %v610 = vpop.f32.mrf.mxu0
      %v611 = vadd.f32 0.0, %v610
      %612 = vmatmul.bf16.gmra.mxu0 %v435
      %v613 = vpop.f32.mrf.mxu0
      %v614 = vadd.f32 0.0, %v613
      %v615 = vpop.f32.mrf.mxu0
      %v616 = vadd.f32 0.0, %v615
      %617 = vmatmul.bf16.gmra.mxu0 %v437
      %v618 = vpop.f32.mrf.mxu0
      %v619 = vadd.f32 0.0, %v618
      %v620 = vpop.f32.mrf.mxu0
      %v621 = vadd.f32 0.0, %v620
      %622 = vmatmul.bf16.gmra.mxu0 %v439
      %v623 = vpop.f32.mrf.mxu0
      %v624 = vadd.f32 0.0, %v623
      %v625 = vpop.f32.mrf.mxu0
      %v626 = vadd.f32 0.0, %v625
      %627 = vmatmul.bf16.gmra.mxu0 %v441
      %v628 = vpop.f32.mrf.mxu0
      %v629 = vadd.f32 0.0, %v628
      %v630 = vpop.f32.mrf.mxu0
      %v631 = vadd.f32 0.0, %v630
      %632 = vmatmul.bf16.gmra.mxu0 %v443
      %v633 = vpop.f32.mrf.mxu0
      %v634 = vadd.f32 0.0, %v633
      %v635 = vpop.f32.mrf.mxu0
      %v636 = vadd.f32 0.0, %v635
      %637 = vmatmul.bf16.gmra.mxu0 %v445
      %v638 = vpop.f32.mrf.mxu0
      %v639 = vadd.f32 0.0, %v638
      %v640 = vpop.f32.mrf.mxu0
      %v641 = vadd.f32 0.0, %v640
      %642 = vmatmul.bf16.gmra.mxu0 %v447
      %v643 = vpop.f32.mrf.mxu0
      %v644 = vadd.f32 0.0, %v643
      %v645 = vpop.f32.mrf.mxu0
      %v646 = vadd.f32 0.0, %v645
      %647 = vmatmul.bf16.gmra.mxu0 %v449
      %v648 = vpop.f32.mrf.mxu0
      %v649 = vadd.f32 0.0, %v648
      %v650 = vpop.f32.mrf.mxu0
      %v651 = vadd.f32 0.0, %v650
      %652 = vmatmul.bf16.gmra.mxu0 %v451
      %v653 = vpop.f32.mrf.mxu0
      %v654 = vadd.f32 0.0, %v653
      %v655 = vpop.f32.mrf.mxu0
      %v656 = vadd.f32 0.0, %v655
      %657 = vmatmul.bf16.gmra.mxu0 %v453
      %v658 = vpop.f32.mrf.mxu0
      %v659 = vadd.f32 0.0, %v658
      %v660 = vpop.f32.mrf.mxu0
      %v661 = vadd.f32 0.0, %v660
      %662 = vmatmul.bf16.gmra.mxu0 %v455
      %v663 = vpop.f32.mrf.mxu0
      %v664 = vadd.f32 0.0, %v663
      %v665 = vpop.f32.mrf.mxu0
      %v666 = vadd.f32 0.0, %v665
      %667 = vmatmul.bf16.gmra.mxu0 %v457
      %v668 = vpop.f32.mrf.mxu0
      %v669 = vadd.f32 0.0, %v668
      %v670 = vpop.f32.mrf.mxu0
      %v671 = vadd.f32 0.0, %v670
      %672 = vmatmul.bf16.gmra.mxu0 %v459
      %v673 = vpop.f32.mrf.mxu0
      %v674 = vadd.f32 0.0, %v673
      %v675 = vpop.f32.mrf.mxu0
      %v676 = vadd.f32 0.0, %v675
      %677 = vdwg.mxu0
      %678 = vmatpush.bf16.msra.mxu0 %v572
      %679 = vmatpush.bf16.msra.mxu0 %v571
      %680 = vmatpush.bf16.msra.mxu0 %v570
      %681 = vmatpush.bf16.msra.mxu0 %v569
      %682 = vmatpush.bf16.msra.mxu0 %v568
      %683 = vmatpush.bf16.msra.mxu0 %v567
      %684 = vmatpush.bf16.msra.mxu0 %v566
      %685 = vmatpush.bf16.msra.mxu0 %v565
      %686 = vmatmul.bf16.gmra.mxu0 %v430
      %v687 = vpop.f32.mrf.mxu0
      %v688 = vadd.f32 %v599, %v687
      %v689 = vpop.f32.mrf.mxu0
      %v690 = vadd.f32 %v601, %v689
      %691 = vmatmul.bf16.gmra.mxu0 %v432
      %v692 = vpop.f32.mrf.mxu0
      %v693 = vadd.f32 %v604, %v692
      %v694 = vpop.f32.mrf.mxu0
      %v695 = vadd.f32 %v606, %v694
      %696 = vmatmul.bf16.gmra.mxu0 %v434
      %v697 = vpop.f32.mrf.mxu0
      %v698 = vadd.f32 %v609, %v697
      %v699 = vpop.f32.mrf.mxu0
      %v700 = vadd.f32 %v611, %v699
      %701 = vmatmul.bf16.gmra.mxu0 %v436
      %v702 = vpop.f32.mrf.mxu0
      %v703 = vadd.f32 %v614, %v702
      %v704 = vpop.f32.mrf.mxu0
      %v705 = vadd.f32 %v616, %v704
      %706 = vmatmul.bf16.gmra.mxu0 %v438
      %v707 = vpop.f32.mrf.mxu0
      %v708 = vadd.f32 %v619, %v707
      %v709 = vpop.f32.mrf.mxu0
      %v710 = vadd.f32 %v621, %v709
      %711 = vmatmul.bf16.gmra.mxu0 %v440
      %v712 = vpop.f32.mrf.mxu0
      %v713 = vadd.f32 %v624, %v712
      %v714 = vpop.f32.mrf.mxu0
      %v715 = vadd.f32 %v626, %v714
      %716 = vmatmul.bf16.gmra.mxu0 %v442
      %v717 = vpop.f32.mrf.mxu0
      %v718 = vadd.f32 %v629, %v717
      %v719 = vpop.f32.mrf.mxu0
      %v720 = vadd.f32 %v631, %v719
      %721 = vmatmul.bf16.gmra.mxu0 %v444
      %v722 = vpop.f32.mrf.mxu0
      %v723 = vadd.f32 %v634, %v722
      %v724 = vpop.f32.mrf.mxu0
      %v725 = vadd.f32 %v636, %v724
      %726 = vmatmul.bf16.gmra.mxu0 %v446
      %v727 = vpop.f32.mrf.mxu0
      %v728 = vadd.f32 %v639, %v727
      %v729 = vpop.f32.mrf.mxu0
      %v730 = vadd.f32 %v641, %v729
      %731 = vmatmul.bf16.gmra.mxu0 %v448
      %v732 = vpop.f32.mrf.mxu0
      %v733 = vadd.f32 %v644, %v732
      %v734 = vpop.f32.mrf.mxu0
      %v735 = vadd.f32 %v646, %v734
      %736 = vmatmul.bf16.gmra.mxu0 %v450
      %v737 = vpop.f32.mrf.mxu0
      %v738 = vadd.f32 %v649, %v737
      %v739 = vpop.f32.mrf.mxu0
      %v740 = vadd.f32 %v651, %v739
      %741 = vmatmul.bf16.gmra.mxu0 %v452
      %v742 = vpop.f32.mrf.mxu0
      %v743 = vadd.f32 %v654, %v742
      %v744 = vpop.f32.mrf.mxu0
      %v745 = vadd.f32 %v656, %v744
      %746 = vmatmul.bf16.gmra.mxu0 %v454
      %v747 = vpop.f32.mrf.mxu0
      %v748 = vadd.f32 %v659, %v747
      %v749 = vpop.f32.mrf.mxu0
      %v750 = vadd.f32 %v661, %v749
      %751 = vmatmul.bf16.gmra.mxu0 %v456
      %v752 = vpop.f32.mrf.mxu0
      %v753 = vadd.f32 %v664, %v752
      %v754 = vpop.f32.mrf.mxu0
      %v755 = vadd.f32 %v666, %v754
      %756 = vmatmul.bf16.gmra.mxu0 %v458
      %v757 = vpop.f32.mrf.mxu0
      %v758 = vadd.f32 %v669, %v757
      %v759 = vpop.f32.mrf.mxu0
      %v760 = vadd.f32 %v671, %v759
      %761 = vmatmul.bf16.gmra.mxu0 %v460
      %v762 = vpop.f32.mrf.mxu0
      %v763 = vadd.f32 %v674, %v762
      %v764 = vpop.f32.mrf.mxu0
      %v765 = vadd.f32 %v676, %v764
      %766 = vdwg.mxu0
      %v767 = vld [vmem:[%s256] sm:$0x1]
      %v769 = vperm.slane %v767, 0
      %v771 = vmul.f32 %v688, %v769
      %v772 = vmul.f32 %v690, %v769
      %v773 = vmul.f32 %v693, %v769
      %v774 = vmul.f32 %v695, %v769
      %v775 = vmul.f32 %v698, %v769
      %v776 = vmul.f32 %v700, %v769
      %v777 = vmul.f32 %v703, %v769
      %v778 = vmul.f32 %v705, %v769
      %v779 = vmul.f32 %v708, %v769
      %v780 = vmul.f32 %v710, %v769
      %v781 = vmul.f32 %v713, %v769
      %v782 = vmul.f32 %v715, %v769
      %v783 = vmul.f32 %v718, %v769
      %v784 = vmul.f32 %v720, %v769
      %v785 = vmul.f32 %v723, %v769
      %v786 = vmul.f32 %v725, %v769
      %v787 = vmul.f32 %v728, %v769
      %v788 = vmul.f32 %v730, %v769
      %v789 = vmul.f32 %v733, %v769
      %v790 = vmul.f32 %v735, %v769
      %v791 = vmul.f32 %v738, %v769
      %v792 = vmul.f32 %v740, %v769
      %v793 = vmul.f32 %v743, %v769
      %v794 = vmul.f32 %v745, %v769
      %v795 = vmul.f32 %v748, %v769
      %v796 = vmul.f32 %v750, %v769
      %v797 = vmul.f32 %v753, %v769
      %v798 = vmul.f32 %v755, %v769
      %v799 = vmul.f32 %v758, %v769
      %v800 = vmul.f32 %v760, %v769
      %v801 = vmul.f32 %v763, %v769
      %v802 = vmul.f32 %v765, %v769
      %v803 = vld [vmem:[%s259] sm:$0x1]
      %v805 = vperm.slane %v803, 0
      %v807 = vadd.f32 %v771, %v805
      %v808 = vadd.f32 %v772, %v805
      %v809 = vadd.f32 %v773, %v805
      %v810 = vadd.f32 %v774, %v805
      %v811 = vadd.f32 %v775, %v805
      %v812 = vadd.f32 %v776, %v805
      %v813 = vadd.f32 %v777, %v805
      %v814 = vadd.f32 %v778, %v805
      %v815 = vadd.f32 %v779, %v805
      %v816 = vadd.f32 %v780, %v805
      %v817 = vadd.f32 %v781, %v805
      %v818 = vadd.f32 %v782, %v805
      %v819 = vadd.f32 %v783, %v805
      %v820 = vadd.f32 %v784, %v805
      %v821 = vadd.f32 %v785, %v805
      %v822 = vadd.f32 %v786, %v805
      %v823 = vadd.f32 %v787, %v805
      %v824 = vadd.f32 %v788, %v805
      %v825 = vadd.f32 %v789, %v805
      %v826 = vadd.f32 %v790, %v805
      %v827 = vadd.f32 %v791, %v805
      %v828 = vadd.f32 %v792, %v805
      %v829 = vadd.f32 %v793, %v805
      %v830 = vadd.f32 %v794, %v805
      %v831 = vadd.f32 %v795, %v805
      %v832 = vadd.f32 %v796, %v805
      %v833 = vadd.f32 %v797, %v805
      %v834 = vadd.f32 %v798, %v805
      %v835 = vadd.f32 %v799, %v805
      %v836 = vadd.f32 %v800, %v805
      %v837 = vadd.f32 %v801, %v805
      %v838 = vadd.f32 %v802, %v805
      %v839 = vmax.f32 %v807, 0.0
      %v840 = vmax.f32 %v808, 0.0
      %v841 = vmax.f32 %v809, 0.0
      %v842 = vmax.f32 %v810, 0.0
      %v843 = vmax.f32 %v811, 0.0
      %v844 = vmax.f32 %v812, 0.0
      %v845 = vmax.f32 %v813, 0.0
      %v846 = vmax.f32 %v814, 0.0
      %v847 = vmax.f32 %v815, 0.0
      %v848 = vmax.f32 %v816, 0.0
      %v849 = vmax.f32 %v817, 0.0
      %v850 = vmax.f32 %v818, 0.0
      %v851 = vmax.f32 %v819, 0.0
      %v852 = vmax.f32 %v820, 0.0
      %v853 = vmax.f32 %v821, 0.0
      %v854 = vmax.f32 %v822, 0.0
      %v855 = vmax.f32 %v823, 0.0
      %v856 = vmax.f32 %v824, 0.0
      %v857 = vmax.f32 %v825, 0.0
      %v858 = vmax.f32 %v826, 0.0
      %v859 = vmax.f32 %v827, 0.0
      %v860 = vmax.f32 %v828, 0.0
      %v861 = vmax.f32 %v829, 0.0
      %v862 = vmax.f32 %v830, 0.0
      %v863 = vmax.f32 %v831, 0.0
      %v864 = vmax.f32 %v832, 0.0
      %v865 = vmax.f32 %v833, 0.0
      %v866 = vmax.f32 %v834, 0.0
      %v867 = vmax.f32 %v835, 0.0
      %v868 = vmax.f32 %v836, 0.0
      %v869 = vmax.f32 %v837, 0.0
      %v870 = vmax.f32 %v838, 0.0
      %v871 = vpack.c.bf16 %v839, %v839
      %v872 = vpack.c.bf16 %v840, %v840
      %v873 = vpack.c.bf16 %v841, %v841
      %v874 = vpack.c.bf16 %v842, %v842
      %v875 = vpack.c.bf16 %v843, %v843
      %v876 = vpack.c.bf16 %v844, %v844
      %v877 = vpack.c.bf16 %v845, %v845
      %v878 = vpack.c.bf16 %v846, %v846
      %v879 = vpack.c.bf16 %v847, %v847
      %v880 = vpack.c.bf16 %v848, %v848
      %v881 = vpack.c.bf16 %v849, %v849
      %v882 = vpack.c.bf16 %v850, %v850
      %v883 = vpack.c.bf16 %v851, %v851
      %v884 = vpack.c.bf16 %v852, %v852
      %v885 = vpack.c.bf16 %v853, %v853
      %v886 = vpack.c.bf16 %v854, %v854
      %v887 = vpack.c.bf16 %v855, %v855
      %v888 = vpack.c.bf16 %v856, %v856
      %v889 = vpack.c.bf16 %v857, %v857
      %v890 = vpack.c.bf16 %v858, %v858
      %v891 = vpack.c.bf16 %v859, %v859
      %v892 = vpack.c.bf16 %v860, %v860
      %v893 = vpack.c.bf16 %v861, %v861
      %v894 = vpack.c.bf16 %v862, %v862
      %v895 = vpack.c.bf16 %v863, %v863
      %v896 = vpack.c.bf16 %v864, %v864
      %v897 = vpack.c.bf16 %v865, %v865
      %v898 = vpack.c.bf16 %v866, %v866
      %v899 = vpack.c.bf16 %v867, %v867
      %v900 = vpack.c.bf16 %v868, %v868
      %v901 = vpack.c.bf16 %v869, %v869
      %v902 = vpack.c.bf16 %v870, %v870
      %903 = vst [vmem:[%s267] sm:$0xf] %v871
      %904 = vst [vmem:[%s267 + $0x4] sm:$0xf] %v872
      %905 = vst [vmem:[%s267 + $0x8] sm:$0xf] %v873
      %906 = vst [vmem:[%s267 + $0xc] sm:$0xf] %v874
      %907 = vst [vmem:[%s267 + $0x10] sm:$0xf] %v875
      %908 = vst [vmem:[%s267 + $0x14] sm:$0xf] %v876
      %909 = vst [vmem:[%s267 + $0x18] sm:$0xf] %v877
      %910 = vst [vmem:[%s267 + $0x1c] sm:$0xf] %v878
      %911 = vst [vmem:[%s267 + $0x20] sm:$0xf] %v879
      %912 = vst [vmem:[%s267 + $0x24] sm:$0xf] %v880
      %913 = vst [vmem:[%s267 + $0x28] sm:$0xf] %v881
      %914 = vst [vmem:[%s267 + $0x2c] sm:$0xf] %v882
      %915 = vst [vmem:[%s267 + $0x30] sm:$0xf] %v883
      %916 = vst [vmem:[%s267 + $0x34] sm:$0xf] %v884
      %917 = vst [vmem:[%s267 + $0x38] sm:$0xf] %v885
      %918 = vst [vmem:[%s267 + $0x3c] sm:$0xf] %v886
      %919 = vst [vmem:[%s267 + $0x40] sm:$0xf] %v887
      %920 = vst [vmem:[%s267 + $0x44] sm:$0xf] %v888
      %921 = vst [vmem:[%s267 + $0x48] sm:$0xf] %v889
      %922 = vst [vmem:[%s267 + $0x4c] sm:$0xf] %v890
      %923 = vst [vmem:[%s267 + $0x50] sm:$0xf] %v891
      %924 = vst [vmem:[%s267 + $0x54] sm:$0xf] %v892
      %925 = vst [vmem:[%s267 + $0x58] sm:$0xf] %v893
      %926 = vst [vmem:[%s267 + $0x5c] sm:$0xf] %v894
      %927 = vst [vmem:[%s267 + $0x60] sm:$0xf] %v895
      %928 = vst [vmem:[%s267 + $0x64] sm:$0xf] %v896
      %929 = vst [vmem:[%s267 + $0x68] sm:$0xf] %v897
      %930 = vst [vmem:[%s267 + $0x6c] sm:$0xf] %v898
      %931 = vst [vmem:[%s267 + $0x70] sm:$0xf] %v899
      %932 = vst [vmem:[%s267 + $0x74] sm:$0xf] %v900
      %933 = vst [vmem:[%s267 + $0x78] sm:$0xf] %v901
      %934 = vst [vmem:[%s267 + $0x7c] sm:$0xf] %v902
      %s935 = smul.u32 32, %s19
      %p936 = scmp.lt.s32.totalorder %s935, 63
      %s937 = scalar_select %p936, %s935, 63
      %p938 = scmp.lt.s32.totalorder %s20, 0
      %s939 = scalar_select %p938, %s20, 0
      %s940 = sadd.s32 %s939, %s937
      %s941 = smul.addr %s940, 4
      %s942 = scalar_lea.vmem %s4, %s941
      // Predicated region
      $region37: #{_stem_forward.2} parent=35 // pred_check
        %p943 = pneg %p151
      $region38: #{_stem_forward.2} parent=35 // pred_check_branch
        %945 = sbr.rel (%p943) target = $region40
      $region39: #{_stem_forward.2} parent=35 // pred_region
        %s946 = smul.u32 32, %s19
      $region40: #{_stem_forward.2} parent=35 // pred_fallthru
        _
    $region36: #{_stem_forward.2} parent=5 // pred_fallthru
      _
    %p947 = scmp.le.s32.totalorder 2, %s10
    // Predicated region
    $region41: #{_stem_forward.2} parent=5 // pred_check
      %p948 = pneg %p947
    $region42: #{_stem_forward.2} parent=5 // pred_check_branch
      %950 = sbr.rel (%p948) target = $region44
    $region43: #{_stem_forward.2} parent=5 // pred_region
      %s951 = ssub.s32 %s10, 2
      // Predicated region
      $region45: #{_stem_forward.2} parent=43 // pred_check
        %p952 = pneg %p157
      $region46: #{_stem_forward.2} parent=43 // pred_check_branch
        %954 = sbr.rel (%p952) target = $region48
      $region47: #{_stem_forward.2} parent=43 // pred_region
        %s955 = smul.u32 32, %s21
        %p956 = scmp.lt.s32.totalorder %s955, 63
        %s957 = scalar_select %p956, %s955, 63
        %p958 = scmp.lt.s32.totalorder %s22, 0
        %s959 = scalar_select %p958, %s22, 0
        %s960 = sadd.s32 %s959, %s957
        %s961 = smul.addr %s960, 4
        %s962 = scalar_lea.vmem %s4, %s961
      $region48: #{_stem_forward.2} parent=43 // pred_fallthru
        _
    $region44: #{_stem_forward.2} parent=5 // pred_fallthru
      _
  $region6: #{_stem_forward.2} parent=0 // loop_footer
    %s14 = sadd.s32 1, %s10
  $region7: #{_stem_forward.2} parent=0 // loop_footer_branch
    %9 = sbr.rel target = $region3
  $region8: #{_stem_forward.2} parent=0 // loop_exit
    _

// kernel: _stem_forward.3
$region0: #{_stem_forward.3}
  #allocation0 [shape = 'u32[]', space=smem, size = 0x4, offset = 0x4, fixed_abs, tag = 'smem constant byte address 0x4 - core index']
  #allocation1 [shape = 'u32[72,128]{1,0:T(1,128)}', space=vmem, size = 0x9000, scoped, tag = 'internal scratch']
  %s0 = inlined_call_operand.vmem [shape: bf16[9,128,128], index: 0, kind: input, shape index: {}]
  %s1 = inlined_call_operand.hbm [shape: bf16[128,128], index: 1, kind: output, shape index: {}]
  %s2 = sld [smem:[#allocation0]]
  $region14: #{_stem_forward.3} parent=0
    _
  %s4 = ssub.s32 1, %s2
  %s5 = scalar_select 0, %s4, %s2
  $region1: #{_stem_forward.3} parent=0
    #allocation2 [shape = 'u8[32768]{0}', space=vmem, size = 0x8000, scoped, tag = 'output window, operand 0, single buffered']
    #allocation3 [shape = 's32[1]{0}', space=sflag, size = 0x4, scoped, tag = 'scoped memory for _stem_forward.3']
    %6 = vsyncpa [#allocation3], 0
    // Predicated region
    $region2: #{_stem_forward.3} parent=1 // pred_check
      _
    $region3: #{_stem_forward.3} parent=1 // pred_check_branch
      %8 = sbr.rel (0) target = $region5
    $region4: #{_stem_forward.3} parent=1 // pred_region
      _
    $region5: #{_stem_forward.3} parent=1 // pred_fallthru
      _
    %v9 = vld [vmem:[%s0] sm:$0xf]
    %v10 = vld [vmem:[%s0 + $0x4] sm:$0xf]
    %v11 = vld [vmem:[%s0 + $0x8] sm:$0xf]
    %v12 = vld [vmem:[%s0 + $0xc] sm:$0xf]
    %v13 = vld [vmem:[%s0 + $0x10] sm:$0xf]
    %v14 = vld [vmem:[%s0 + $0x14] sm:$0xf]
    %v15 = vld [vmem:[%s0 + $0x18] sm:$0xf]
    %v16 = vld [vmem:[%s0 + $0x1c] sm:$0xf]
    %v17 = vld [vmem:[%s0 + $0x20] sm:$0xf]
    %v18 = vld [vmem:[%s0 + $0x24] sm:$0xf]
    %v19 = vld [vmem:[%s0 + $0x28] sm:$0xf]
    %v20 = vld [vmem:[%s0 + $0x2c] sm:$0xf]
    %v21 = vld [vmem:[%s0 + $0x30] sm:$0xf]
    %v22 = vld [vmem:[%s0 + $0x34] sm:$0xf]
    %v23 = vld [vmem:[%s0 + $0x38] sm:$0xf]
    %v24 = vld [vmem:[%s0 + $0x3c] sm:$0xf]
    %v25 = vld [vmem:[%s0 + $0x40] sm:$0xf]
    %v26 = vld [vmem:[%s0 + $0x44] sm:$0xf]
    %v27 = vld [vmem:[%s0 + $0x48] sm:$0xf]
    %v28 = vld [vmem:[%s0 + $0x4c] sm:$0xf]
    %v29 = vld [vmem:[%s0 + $0x50] sm:$0xf]
    %v30 = vld [vmem:[%s0 + $0x54] sm:$0xf]
    %v31 = vld [vmem:[%s0 + $0x58] sm:$0xf]
    %v32 = vld [vmem:[%s0 + $0x5c] sm:$0xf]
    %v33 = vld [vmem:[%s0 + $0x60] sm:$0xf]
    %v34 = vld [vmem:[%s0 + $0x64] sm:$0xf]
    %v35 = vld [vmem:[%s0 + $0x68] sm:$0xf]
    %v36 = vld [vmem:[%s0 + $0x6c] sm:$0xf]
    %v37 = vld [vmem:[%s0 + $0x70] sm:$0xf]
    %v38 = vld [vmem:[%s0 + $0x74] sm:$0xf]
    %v39 = vld [vmem:[%s0 + $0x78] sm:$0xf]
    %v40 = vld [vmem:[%s0 + $0x7c] sm:$0xf]
    %v41 = vld [vmem:[%s0 + $0x80] sm:$0xf]
    %v42 = vld [vmem:[%s0 + $0x84] sm:$0xf]
    %v43 = vld [vmem:[%s0 + $0x88] sm:$0xf]
    %v44 = vld [vmem:[%s0 + $0x8c] sm:$0xf]
    %v45 = vld [vmem:[%s0 + $0x90] sm:$0xf]
    %v46 = vld [vmem:[%s0 + $0x94] sm:$0xf]
    %v47 = vld [vmem:[%s0 + $0x98] sm:$0xf]
    %v48 = vld [vmem:[%s0 + $0x9c] sm:$0xf]
    %v49 = vld [vmem:[%s0 + $0xa0] sm:$0xf]
    %v50 = vld [vmem:[%s0 + $0xa4] sm:$0xf]
    %v51 = vld [vmem:[%s0 + $0xa8] sm:$0xf]
    %v52 = vld [vmem:[%s0 + $0xac] sm:$0xf]
    %v53 = vld [vmem:[%s0 + $0xb0] sm:$0xf]
    %v54 = vld [vmem:[%s0 + $0xb4] sm:$0xf]
    %v55 = vld [vmem:[%s0 + $0xb8] sm:$0xf]
    %v56 = vld [vmem:[%s0 + $0xbc] sm:$0xf]
    %v57 = vld [vmem:[%s0 + $0xc0] sm:$0xf]
    %v58 = vld [vmem:[%s0 + $0xc4] sm:$0xf]
    %v59 = vld [vmem:[%s0 + $0xc8] sm:$0xf]
    %v60 = vld [vmem:[%s0 + $0xcc] sm:$0xf]
    %v61 = vld [vmem:[%s0 + $0xd0] sm:$0xf]
    %v62 = vld [vmem:[%s0 + $0xd4] sm:$0xf]
    %v63 = vld [vmem:[%s0 + $0xd8] sm:$0xf]
    %v64 = vld [vmem:[%s0 + $0xdc] sm:$0xf]
    %v65 = vld [vmem:[%s0 + $0xe0] sm:$0xf]
    %v66 = vld [vmem:[%s0 + $0xe4] sm:$0xf]
    %v67 = vld [vmem:[%s0 + $0xe8] sm:$0xf]
    %v68 = vld [vmem:[%s0 + $0xec] sm:$0xf]
    %v69 = vld [vmem:[%s0 + $0xf0] sm:$0xf]
    %v70 = vld [vmem:[%s0 + $0xf4] sm:$0xf]
    %v71 = vld [vmem:[%s0 + $0xf8] sm:$0xf]
    %v72 = vld [vmem:[%s0 + $0xfc] sm:$0xf]
    %v73 = vld [vmem:[%s0 + $0x100] sm:$0xf]
    %v74 = vld [vmem:[%s0 + $0x104] sm:$0xf]
    %v75 = vld [vmem:[%s0 + $0x108] sm:$0xf]
    %v76 = vld [vmem:[%s0 + $0x10c] sm:$0xf]
    %v77 = vld [vmem:[%s0 + $0x110] sm:$0xf]
    %v78 = vld [vmem:[%s0 + $0x114] sm:$0xf]
    %v79 = vld [vmem:[%s0 + $0x118] sm:$0xf]
    %v80 = vld [vmem:[%s0 + $0x11c] sm:$0xf]
    %v81 = vld [vmem:[%s0 + $0x120] sm:$0xf]
    %v82 = vld [vmem:[%s0 + $0x124] sm:$0xf]
    %v83 = vld [vmem:[%s0 + $0x128] sm:$0xf]
    %v84 = vld [vmem:[%s0 + $0x12c] sm:$0xf]
    %v85 = vld [vmem:[%s0 + $0x130] sm:$0xf]
    %v86 = vld [vmem:[%s0 + $0x134] sm:$0xf]
    %v87 = vld [vmem:[%s0 + $0x138] sm:$0xf]
    %v88 = vld [vmem:[%s0 + $0x13c] sm:$0xf]
    %v89 = vld [vmem:[%s0 + $0x140] sm:$0xf]
    %v90 = vld [vmem:[%s0 + $0x144] sm:$0xf]
    %v91 = vld [vmem:[%s0 + $0x148] sm:$0xf]
    %v92 = vld [vmem:[%s0 + $0x14c] sm:$0xf]
    %v93 = vld [vmem:[%s0 + $0x150] sm:$0xf]
    %v94 = vld [vmem:[%s0 + $0x154] sm:$0xf]
    %v95 = vld [vmem:[%s0 + $0x158] sm:$0xf]
    %v96 = vld [vmem:[%s0 + $0x15c] sm:$0xf]
    %v97 = vld [vmem:[%s0 + $0x160] sm:$0xf]
    %v98 = vld [vmem:[%s0 + $0x164] sm:$0xf]
    %v99 = vld [vmem:[%s0 + $0x168] sm:$0xf]
    %v100 = vld [vmem:[%s0 + $0x16c] sm:$0xf]
    %v101 = vld [vmem:[%s0 + $0x170] sm:$0xf]
    %v102 = vld [vmem:[%s0 + $0x174] sm:$0xf]
    %v103 = vld [vmem:[%s0 + $0x178] sm:$0xf]
    %v104 = vld [vmem:[%s0 + $0x17c] sm:$0xf]
    %v105 = vld [vmem:[%s0 + $0x180] sm:$0xf]
    %v106 = vld [vmem:[%s0 + $0x184] sm:$0xf]
    %v107 = vld [vmem:[%s0 + $0x188] sm:$0xf]
    %v108 = vld [vmem:[%s0 + $0x18c] sm:$0xf]
    %v109 = vld [vmem:[%s0 + $0x190] sm:$0xf]
    %v110 = vld [vmem:[%s0 + $0x194] sm:$0xf]
    %v111 = vld [vmem:[%s0 + $0x198] sm:$0xf]
    %v112 = vld [vmem:[%s0 + $0x19c] sm:$0xf]
    %v113 = vld [vmem:[%s0 + $0x1a0] sm:$0xf]
    %v114 = vld [vmem:[%s0 + $0x1a4] sm:$0xf]
    %v115 = vld [vmem:[%s0 + $0x1a8] sm:$0xf]
    %v116 = vld [vmem:[%s0 + $0x1ac] sm:$0xf]
    %v117 = vld [vmem:[%s0 + $0x1b0] sm:$0xf]
    %v118 = vld [vmem:[%s0 + $0x1b4] sm:$0xf]
    %v119 = vld [vmem:[%s0 + $0x1b8] sm:$0xf]
    %v120 = vld [vmem:[%s0 + $0x1bc] sm:$0xf]
    %v121 = vld [vmem:[%s0 + $0x1c0] sm:$0xf]
    %v122 = vld [vmem:[%s0 + $0x1c4] sm:$0xf]
    %v123 = vld [vmem:[%s0 + $0x1c8] sm:$0xf]
    %v124 = vld [vmem:[%s0 + $0x1cc] sm:$0xf]
    %v125 = vld [vmem:[%s0 + $0x1d0] sm:$0xf]
    %v126 = vld [vmem:[%s0 + $0x1d4] sm:$0xf]
    %v127 = vld [vmem:[%s0 + $0x1d8] sm:$0xf]
    %v128 = vld [vmem:[%s0 + $0x1dc] sm:$0xf]
    %v129 = vld [vmem:[%s0 + $0x1e0] sm:$0xf]
    %v130 = vld [vmem:[%s0 + $0x1e4] sm:$0xf]
    %v131 = vld [vmem:[%s0 + $0x1e8] sm:$0xf]
    %v132 = vld [vmem:[%s0 + $0x1ec] sm:$0xf]
    %v133 = vld [vmem:[%s0 + $0x1f0] sm:$0xf]
    %v134 = vld [vmem:[%s0 + $0x1f4] sm:$0xf]
    %v135 = vld [vmem:[%s0 + $0x1f8] sm:$0xf]
    %v136 = vld [vmem:[%s0 + $0x1fc] sm:$0xf]
    %v137 = vld [vmem:[%s0 + $0x200] sm:$0xf]
    %v138 = vld [vmem:[%s0 + $0x204] sm:$0xf]
    %v139 = vld [vmem:[%s0 + $0x208] sm:$0xf]
    %v140 = vld [vmem:[%s0 + $0x20c] sm:$0xf]
    %v141 = vld [vmem:[%s0 + $0x210] sm:$0xf]
    %v142 = vld [vmem:[%s0 + $0x214] sm:$0xf]
    %v143 = vld [vmem:[%s0 + $0x218] sm:$0xf]
    %v144 = vld [vmem:[%s0 + $0x21c] sm:$0xf]
    %v145 = vld [vmem:[%s0 + $0x220] sm:$0xf]
    %v146 = vld [vmem:[%s0 + $0x224] sm:$0xf]
    %v147 = vld [vmem:[%s0 + $0x228] sm:$0xf]
    %v148 = vld [vmem:[%s0 + $0x22c] sm:$0xf]
    %v149 = vld [vmem:[%s0 + $0x230] sm:$0xf]
    %v150 = vld [vmem:[%s0 + $0x234] sm:$0xf]
    %v151 = vld [vmem:[%s0 + $0x238] sm:$0xf]
    %v152 = vld [vmem:[%s0 + $0x23c] sm:$0xf]
    %v153 = vunpack.c.l.bf16 %v9
    %v154 = vunpack.c.l.bf16 %v10
    %v155 = vunpack.c.l.bf16 %v11
    %v156 = vunpack.c.l.bf16 %v12
    %v157 = vunpack.c.l.bf16 %v13
    %v158 = vunpack.c.l.bf16 %v14
    %v159 = vunpack.c.l.bf16 %v15
    %v160 = vunpack.c.l.bf16 %v16
    %v161 = vunpack.c.l.bf16 %v17
    %v162 = vunpack.c.l.bf16 %v18
    %v163 = vunpack.c.l.bf16 %v19
    %v164 = vunpack.c.l.bf16 %v20
    %v165 = vunpack.c.l.bf16 %v21
    %v166 = vunpack.c.l.bf16 %v22
    %v167 = vunpack.c.l.bf16 %v23
    %v168 = vunpack.c.l.bf16 %v24
    %v169 = vunpack.c.l.bf16 %v25
    %v170 = vunpack.c.l.bf16 %v26
    %v171 = vunpack.c.l.bf16 %v27
    %v172 = vunpack.c.l.bf16 %v28
    %v173 = vunpack.c.l.bf16 %v29
    %v174 = vunpack.c.l.bf16 %v30
    %v175 = vunpack.c.l.bf16 %v31
    %v176 = vunpack.c.l.bf16 %v32
    %v177 = vunpack.c.l.bf16 %v33
    %v178 = vunpack.c.l.bf16 %v34
    %v179 = vunpack.c.l.bf16 %v35
    %v180 = vunpack.c.l.bf16 %v36
    %v181 = vunpack.c.l.bf16 %v37
    %v182 = vunpack.c.l.bf16 %v38
    %v183 = vunpack.c.l.bf16 %v39
    %v184 = vunpack.c.l.bf16 %v40
    %v185 = vunpack.c.l.bf16 %v41
    %v186 = vunpack.c.l.bf16 %v42
    %v187 = vunpack.c.l.bf16 %v43
    %v188 = vunpack.c.l.bf16 %v44
    %v189 = vunpack.c.l.bf16 %v45
    %v190 = vunpack.c.l.bf16 %v46
    %v191 = vunpack.c.l.bf16 %v47
    %v192 = vunpack.c.l.bf16 %v48
    %v193 = vunpack.c.l.bf16 %v49
    %v194 = vunpack.c.l.bf16 %v50
    %v195 = vunpack.c.l.bf16 %v51
    %v196 = vunpack.c.l.bf16 %v52
    %v197 = vunpack.c.l.bf16 %v53
    %v198 = vunpack.c.l.bf16 %v54
    %v199 = vunpack.c.l.bf16 %v55
    %v200 = vunpack.c.l.bf16 %v56
    %v201 = vunpack.c.l.bf16 %v57
    %v202 = vunpack.c.l.bf16 %v58
    %v203 = vunpack.c.l.bf16 %v59
    %v204 = vunpack.c.l.bf16 %v60
    %v205 = vunpack.c.l.bf16 %v61
    %v206 = vunpack.c.l.bf16 %v62
    %v207 = vunpack.c.l.bf16 %v63
    %v208 = vunpack.c.l.bf16 %v64
    %v209 = vunpack.c.l.bf16 %v65
    %v210 = vunpack.c.l.bf16 %v66
    %v211 = vunpack.c.l.bf16 %v67
    %v212 = vunpack.c.l.bf16 %v68
    %v213 = vunpack.c.l.bf16 %v69
    %v214 = vunpack.c.l.bf16 %v70
    %v215 = vunpack.c.l.bf16 %v71
    %v216 = vunpack.c.l.bf16 %v72
    %v217 = vunpack.c.l.bf16 %v73
    %v218 = vunpack.c.l.bf16 %v74
    %v219 = vunpack.c.l.bf16 %v75
    %v220 = vunpack.c.l.bf16 %v76
    %v221 = vunpack.c.l.bf16 %v77
    %v222 = vunpack.c.l.bf16 %v78
    %v223 = vunpack.c.l.bf16 %v79
    %v224 = vunpack.c.l.bf16 %v80
    %v225 = vunpack.c.l.bf16 %v81
    %v226 = vunpack.c.l.bf16 %v82
    %v227 = vunpack.c.l.bf16 %v83
    %v228 = vunpack.c.l.bf16 %v84
    %v229 = vunpack.c.l.bf16 %v85
    %v230 = vunpack.c.l.bf16 %v86
    %v231 = vunpack.c.l.bf16 %v87
    %v232 = vunpack.c.l.bf16 %v88
    %v233 = vunpack.c.l.bf16 %v89
    %v234 = vunpack.c.l.bf16 %v90
    %v235 = vunpack.c.l.bf16 %v91
    %v236 = vunpack.c.l.bf16 %v92
    %v237 = vunpack.c.l.bf16 %v93
    %v238 = vunpack.c.l.bf16 %v94
    %v239 = vunpack.c.l.bf16 %v95
    %v240 = vunpack.c.l.bf16 %v96
    %v241 = vunpack.c.l.bf16 %v97
    %v242 = vunpack.c.l.bf16 %v98
    %v243 = vunpack.c.l.bf16 %v99
    %v244 = vunpack.c.l.bf16 %v100
    %v245 = vunpack.c.l.bf16 %v101
    %v246 = vunpack.c.l.bf16 %v102
    %v247 = vunpack.c.l.bf16 %v103
    %v248 = vunpack.c.l.bf16 %v104
    %v249 = vunpack.c.l.bf16 %v105
    %v250 = vunpack.c.l.bf16 %v106
    %v251 = vunpack.c.l.bf16 %v107
    %v252 = vunpack.c.l.bf16 %v108
    %v253 = vunpack.c.l.bf16 %v109
    %v254 = vunpack.c.l.bf16 %v110
    %v255 = vunpack.c.l.bf16 %v111
    %v256 = vunpack.c.l.bf16 %v112
    %v257 = vunpack.c.l.bf16 %v113
    %v258 = vunpack.c.l.bf16 %v114
    %v259 = vunpack.c.l.bf16 %v115
    %v260 = vunpack.c.l.bf16 %v116
    %v261 = vunpack.c.l.bf16 %v117
    %v262 = vunpack.c.l.bf16 %v118
    %v263 = vunpack.c.l.bf16 %v119
    %v264 = vunpack.c.l.bf16 %v120
    %v265 = vunpack.c.l.bf16 %v121
    %v266 = vunpack.c.l.bf16 %v122
    %v267 = vunpack.c.l.bf16 %v123
    %v268 = vunpack.c.l.bf16 %v124
    %v269 = vunpack.c.l.bf16 %v125
    %v270 = vunpack.c.l.bf16 %v126
    %v271 = vunpack.c.l.bf16 %v127
    %v272 = vunpack.c.l.bf16 %v128
    %v273 = vunpack.c.l.bf16 %v129
    %v274 = vunpack.c.l.bf16 %v130
    %v275 = vunpack.c.l.bf16 %v131
    %v276 = vunpack.c.l.bf16 %v132
    %v277 = vunpack.c.l.bf16 %v133
    %v278 = vunpack.c.l.bf16 %v134
    %v279 = vunpack.c.l.bf16 %v135
    %v280 = vunpack.c.l.bf16 %v136
    %v281 = vunpack.c.l.bf16 %v137
    %v282 = vunpack.c.l.bf16 %v138
    %v283 = vunpack.c.l.bf16 %v139
    %v284 = vunpack.c.l.bf16 %v140
    %v285 = vunpack.c.l.bf16 %v141
    %v286 = vunpack.c.l.bf16 %v142
    %v287 = vunpack.c.l.bf16 %v143
    %v288 = vunpack.c.l.bf16 %v144
    %v289 = vunpack.c.l.bf16 %v145
    %v290 = vunpack.c.l.bf16 %v146
    %v291 = vunpack.c.l.bf16 %v147
    %v292 = vunpack.c.l.bf16 %v148
    %v293 = vunpack.c.l.bf16 %v149
    %v294 = vunpack.c.l.bf16 %v150
    %v295 = vunpack.c.l.bf16 %v151
    %v296 = vunpack.c.l.bf16 %v152
    %v297 = vmax.f32 %v153, %v169
    %v298 = vmax.f32 %v297, %v185
    %v299 = vmax.f32 %v298, %v201
    %v300 = vmax.f32 %v299, %v217
    %v301 = vmax.f32 %v300, %v233
    %v302 = vmax.f32 %v301, %v249
    %v303 = vmax.f32 %v302, %v265
    %v304 = vmax.f32 %v303, %v281
    %v305 = vmax.f32 %v154, %v170
    %v306 = vmax.f32 %v305, %v186
    %v307 = vmax.f32 %v306, %v202
    %v308 = vmax.f32 %v307, %v218
    %v309 = vmax.f32 %v308, %v234
    %v310 = vmax.f32 %v309, %v250
    %v311 = vmax.f32 %v310, %v266
    %v312 = vmax.f32 %v311, %v282
    %v313 = vmax.f32 %v155, %v171
    %v314 = vmax.f32 %v313, %v187
    %v315 = vmax.f32 %v314, %v203
    %v316 = vmax.f32 %v315, %v219
    %v317 = vmax.f32 %v316, %v235
    %v318 = vmax.f32 %v317, %v251
    %v319 = vmax.f32 %v318, %v267
    %v320 = vmax.f32 %v319, %v283
    %v321 = vmax.f32 %v156, %v172
    %v322 = vmax.f32 %v321, %v188
    %v323 = vmax.f32 %v322, %v204
    %v324 = vmax.f32 %v323, %v220
    %v325 = vmax.f32 %v324, %v236
    %v326 = vmax.f32 %v325, %v252
    %v327 = vmax.f32 %v326, %v268
    %v328 = vmax.f32 %v327, %v284
    %v329 = vmax.f32 %v157, %v173
    %v330 = vmax.f32 %v329, %v189
    %v331 = vmax.f32 %v330, %v205
    %v332 = vmax.f32 %v331, %v221
    %v333 = vmax.f32 %v332, %v237
    %v334 = vmax.f32 %v333, %v253
    %v335 = vmax.f32 %v334, %v269
    %v336 = vmax.f32 %v335, %v285
    %v337 = vmax.f32 %v158, %v174
    %v338 = vmax.f32 %v337, %v190
    %v339 = vmax.f32 %v338, %v206
    %v340 = vmax.f32 %v339, %v222
    %v341 = vmax.f32 %v340, %v238
    %v342 = vmax.f32 %v341, %v254
    %v343 = vmax.f32 %v342, %v270
    %v344 = vmax.f32 %v343, %v286
    %v345 = vmax.f32 %v159, %v175
    %v346 = vmax.f32 %v345, %v191
    %v347 = vmax.f32 %v346, %v207
    %v348 = vmax.f32 %v347, %v223
    %v349 = vmax.f32 %v348, %v239
    %v350 = vmax.f32 %v349, %v255
    %v351 = vmax.f32 %v350, %v271
    %v352 = vmax.f32 %v351, %v287
    %v353 = vmax.f32 %v160, %v176
    %v354 = vmax.f32 %v353, %v192
    %v355 = vmax.f32 %v354, %v208
    %v356 = vmax.f32 %v355, %v224
    %v357 = vmax.f32 %v356, %v240
    %v358 = vmax.f32 %v357, %v256
    %v359 = vmax.f32 %v358, %v272
    %v360 = vmax.f32 %v359, %v288
    %v361 = vmax.f32 %v161, %v177
    %v362 = vmax.f32 %v361, %v193
    %v363 = vmax.f32 %v362, %v209
    %v364 = vmax.f32 %v363, %v225
    %v365 = vmax.f32 %v364, %v241
    %v366 = vmax.f32 %v365, %v257
    %v367 = vmax.f32 %v366, %v273
    %v368 = vmax.f32 %v367, %v289
    %v369 = vmax.f32 %v162, %v178
    %v370 = vmax.f32 %v369, %v194
    %v371 = vmax.f32 %v370, %v210
    %v372 = vmax.f32 %v371, %v226
    %v373 = vmax.f32 %v372, %v242
    %v374 = vmax.f32 %v373, %v258
    %v375 = vmax.f32 %v374, %v274
    %v376 = vmax.f32 %v375, %v290
    %v377 = vmax.f32 %v163, %v179
    %v378 = vmax.f32 %v377, %v195
    %v379 = vmax.f32 %v378, %v211
    %v380 = vmax.f32 %v379, %v227
    %v381 = vmax.f32 %v380, %v243
    %v382 = vmax.f32 %v381, %v259
    %v383 = vmax.f32 %v382, %v275
    %v384 = vmax.f32 %v383, %v291
    %v385 = vmax.f32 %v164, %v180
    %v386 = vmax.f32 %v385, %v196
    %v387 = vmax.f32 %v386, %v212
    %v388 = vmax.f32 %v387, %v228
    %v389 = vmax.f32 %v388, %v244
    %v390 = vmax.f32 %v389, %v260
    %v391 = vmax.f32 %v390, %v276
    %v392 = vmax.f32 %v391, %v292
    %v393 = vmax.f32 %v165, %v181
    %v394 = vmax.f32 %v393, %v197
    %v395 = vmax.f32 %v394, %v213
    %v396 = vmax.f32 %v395, %v229
    %v397 = vmax.f32 %v396, %v245
    %v398 = vmax.f32 %v397, %v261
    %v399 = vmax.f32 %v398, %v277
    %v400 = vmax.f32 %v399, %v293
    %v401 = vmax.f32 %v166, %v182
    %v402 = vmax.f32 %v401, %v198
    %v403 = vmax.f32 %v402, %v214
    %v404 = vmax.f32 %v403, %v230
    %v405 = vmax.f32 %v404, %v246
    %v406 = vmax.f32 %v405, %v262
    %v407 = vmax.f32 %v406, %v278
    %v408 = vmax.f32 %v407, %v294
    %v409 = vmax.f32 %v167, %v183
    %v410 = vmax.f32 %v409, %v199
    %v411 = vmax.f32 %v410, %v215
    %v412 = vmax.f32 %v411, %v231
    %v413 = vmax.f32 %v412, %v247
    %v414 = vmax.f32 %v413, %v263
    %v415 = vmax.f32 %v414, %v279
    %v416 = vmax.f32 %v415, %v295
    %v417 = vmax.f32 %v168, %v184
    %v418 = vmax.f32 %v417, %v200
    %v419 = vmax.f32 %v418, %v216
    %v420 = vmax.f32 %v419, %v232
    %v421 = vmax.f32 %v420, %v248
    %v422 = vmax.f32 %v421, %v264
    %v423 = vmax.f32 %v422, %v280
    %v424 = vmax.f32 %v423, %v296
    %v425 = vpack.c.bf16 %v304, %v304
    %v426 = vpack.c.bf16 %v312, %v312
    %v427 = vpack.c.bf16 %v320, %v320
    %v428 = vpack.c.bf16 %v328, %v328
    %v429 = vpack.c.bf16 %v336, %v336
    %v430 = vpack.c.bf16 %v344, %v344
    %v431 = vpack.c.bf16 %v352, %v352
    %v432 = vpack.c.bf16 %v360, %v360
    %v433 = vpack.c.bf16 %v368, %v368
    %v434 = vpack.c.bf16 %v376, %v376
    %v435 = vpack.c.bf16 %v384, %v384
    %v436 = vpack.c.bf16 %v392, %v392
    %v437 = vpack.c.bf16 %v400, %v400
    %v438 = vpack.c.bf16 %v408, %v408
    %v439 = vpack.c.bf16 %v416, %v416
    %v440 = vpack.c.bf16 %v424, %v424
    %441 = vst [vmem:[#allocation2] sm:$0xf] %v425
    %442 = vst [vmem:[#allocation2 + $0x4] sm:$0xf] %v426
    %443 = vst [vmem:[#allocation2 + $0x8] sm:$0xf] %v427
    %444 = vst [vmem:[#allocation2 + $0xc] sm:$0xf] %v428
    %445 = vst [vmem:[#allocation2 + $0x10] sm:$0xf] %v429
    %446 = vst [vmem:[#allocation2 + $0x14] sm:$0xf] %v430
    %447 = vst [vmem:[#allocation2 + $0x18] sm:$0xf] %v431
    %448 = vst [vmem:[#allocation2 + $0x1c] sm:$0xf] %v432
    %449 = vst [vmem:[#allocation2 + $0x20] sm:$0xf] %v433
    %450 = vst [vmem:[#allocation2 + $0x24] sm:$0xf] %v434
    %451 = vst [vmem:[#allocation2 + $0x28] sm:$0xf] %v435
    %452 = vst [vmem:[#allocation2 + $0x2c] sm:$0xf] %v436
    %453 = vst [vmem:[#allocation2 + $0x30] sm:$0xf] %v437
    %454 = vst [vmem:[#allocation2 + $0x34] sm:$0xf] %v438
    %455 = vst [vmem:[#allocation2 + $0x38] sm:$0xf] %v439
    %456 = vst [vmem:[#allocation2 + $0x3c] sm:$0xf] %v440
    // Predicated region
    $region6: #{_stem_forward.3} parent=1 // pred_check
      _
    $region7: #{_stem_forward.3} parent=1 // pred_check_branch
      %458 = sbr.rel (0) target = $region9
    $region8: #{_stem_forward.3} parent=1 // pred_region
      %460 = vsyncadd [#allocation3], 0
      %s461 = sshll.u32 [#allocation2], 4
      %s462 = int_to_ptr.vmem [resolvable:$true] %s461
      %s463 = sshll.u32 %s1, 4
      %s464 = int_to_ptr.hbm [resolvable:$true] %s463
      %469 = dma.vmem_to_hbm [thread:$0]  %s462, 1024, %s464, [#allocation3], 64, 64, 4
    $region9: #{_stem_forward.3} parent=1 // pred_fallthru
      _
    // Predicated region
    $region10: #{_stem_forward.3} parent=1 // pred_check
      _
    $region11: #{_stem_forward.3} parent=1 // pred_check_branch
      %471 = sbr.rel (0) target = $region13
    $region12: #{_stem_forward.3} parent=1 // pred_region
      %473 = dma.done [#allocation3], 1024
    $region13: #{_stem_forward.3} parent=1 // pred_fallthru
      _
    %474 = vsyncpa [#allocation3], 1

</llo_original>
